<compile_context>
chip_gen: v7x
topology: tpu7x:2x2x1
jax: 0.10.0
libtpu: 0.0.40
codegen_flags: <defaults>
</compile_context>

<pallas_src>
import math

import jax
import jax.numpy as jnp
from jax.experimental import pallas as pl
from jax.experimental.pallas import tpu as pltpu

_LANES = 128
_SSE_TILE_BYTES = 2 << 20    # ~2 MiB per input block (4096 rows of 128 f32)
_PROP_TILE_BYTES = 2 << 20   # ~2 MiB per input block for the property kernel


# ----------------------------------------------------------------------------
# Kernel 1: sum of squared errors over a (rows, 128) f32 slab.
# 1-D grid over row tiles; accumulate sublane-group-reduced d^2 directly into
# the resident (8, 128) output block; element mask only on the edge tile.
# ----------------------------------------------------------------------------
def _make_sse_kernel(n_rows, tile_rows):
    n_groups = tile_rows // 8
    num_tiles = -(-n_rows // tile_rows)
    last_valid = n_rows - (num_tiles - 1) * tile_rows     # valid rows, edge tile
    has_edge = (n_rows % tile_rows) != 0                  # trace-time bool

    def kernel(a_ref, b_ref, out_ref):
        t = pl.program_id(0)

        @pl.when(t == 0)
        def _():
            out_ref[...] = jnp.zeros_like(out_ref)

        def accum(masked):
            d = a_ref[...] - b_ref[...]
            dd = d * d
            if masked:
                rid = jax.lax.broadcasted_iota(
                    jnp.int32, (tile_rows, _LANES), 0)
                dd = jnp.where(rid < last_valid, dd, 0.0)
            # free reshape (splits the sublane-major axis) + VPU adds
            out_ref[...] += jnp.sum(dd.reshape(n_groups, 8, _LANES), axis=0)

        if has_edge:
            nt = pl.num_programs(0)

            @pl.when(t != nt - 1)
            def _():
                accum(False)

            @pl.when(t == nt - 1)
            def _():
                accum(True)
        else:
            accum(False)

    return kernel


def _sse_pallas(a2d, b2d):
    n_rows = a2d.shape[0]
    max_rows = max(8, (_SSE_TILE_BYTES // (_LANES * 4)) // 8 * 8)   # 4096
    tile_rows = min(n_rows, max_rows)                               # mult. of 8
    num_tiles = pl.cdiv(n_rows, tile_rows)

    out = pl.pallas_call(
        _make_sse_kernel(n_rows, tile_rows),
        out_shape=jax.ShapeDtypeStruct((8, _LANES), jnp.float32),
        grid_spec=pltpu.PrefetchScalarGridSpec(
            num_scalar_prefetch=0,
            grid=(num_tiles,),
            in_specs=[pl.BlockSpec((tile_rows, _LANES), lambda t: (t, 0)),
                      pl.BlockSpec((tile_rows, _LANES), lambda t: (t, 0))],
            out_specs=pl.BlockSpec((8, _LANES), lambda t: (0, 0)),
        ),
        compiler_params=pltpu.CompilerParams(
            dimension_semantics=("arbitrary",)),
    )(a2d, b2d)
    return jnp.sum(out)


def _as_rows128(x):
    flat = jnp.asarray(x, jnp.float32).reshape(-1)
    n = flat.shape[0]
    pad = (-n) % (8 * _LANES)
    if pad:
        # TODO(synk): jnp.pad materializes a copy; only taken when numel is not
        # a multiple of 1024.  Zero padding contributes 0 to the SSE.
        flat = jnp.pad(flat, (0, pad))
    return flat.reshape(-1, _LANES), n


def _mse(a, b):
    a2d, n = _as_rows128(a)
    b2d, _ = _as_rows128(b)
    return _sse_pallas(a2d, b2d) / jnp.float32(n)


# ----------------------------------------------------------------------------
# Kernel 2 (fused, lane-dense): single pass over the flat channels-last
# property stream viewed as (rows, W), W = Gpix * n_ch (multiple of 128).
#   * per-column SSE accumulated into a resident (8, W) output block
#     (-> per-channel / group SSE in the wrapper),
#   * per-pixel clamped normal dot via a (rows, W) @ (W, Gpix) 0/1 selection
#     matmul on the MXU (lane-dense loads, no cross-lane reduce).
# ----------------------------------------------------------------------------
def _make_prop_kernel(n_rows, tile_rows, w):
    n_groups = tile_rows // 8
    num_tiles = -(-n_rows // tile_rows)
    last_valid = n_rows - (num_tiles - 1) * tile_rows
    has_edge = (n_rows % tile_rows) != 0

    def kernel(p_ref, g_ref, sel_ref, dots_ref, chacc_ref):
        t = pl.program_id(0)

        @pl.when(t == 0)
        def _():
            chacc_ref[...] = jnp.zeros_like(chacc_ref)

        p = p_ref[...]
        g = g_ref[...]
        d = p - g
        dd = d * d

        def accum_sse(masked):
            x = dd
            if masked:
                rid = jax.lax.broadcasted_iota(jnp.int32, (tile_rows, w), 0)
                x = jnp.where(rid < last_valid, x, 0.0)
            chacc_ref[...] += jnp.sum(x.reshape(n_groups, 8, w), axis=0)

        if has_edge:
            nt = pl.num_programs(0)

            @pl.when(t != nt - 1)
            def _():
                accum_sse(False)

            @pl.when(t == nt - 1)
            def _():
                accum_sse(True)
        else:
            accum_sse(False)

        # Selection matmul: exact 3-term per-pixel dot on the otherwise-idle
        # MXU (HIGHEST precision avoids bf16 truncation of the products).
        dots = jnp.dot(p * g, sel_ref[...],
                       preferred_element_type=jnp.float32,
                       precision=jax.lax.Precision.HIGHEST)
        # Garbage rows of the edge tile land beyond n_pix and are sliced off
        # in the wrapper before arccos/mean.
        dots_ref[...] = jnp.clip(dots, -1.0, 1.0)

    return kernel


def _prop_metrics_pallas(p2d, g2d, sel, n_ch, gpix):
    n_rows, w = p2d.shape
    max_rows = max(8, (_PROP_TILE_BYTES // (w * 4)) // 8 * 8)
    tile_rows = min(n_rows, max_rows)                      # multiple of 8
    num_tiles = pl.cdiv(n_rows, tile_rows)

    dots, chacc = pl.pallas_call(
        _make_prop_kernel(n_rows, tile_rows, w),
        out_shape=(
            jax.ShapeDtypeStruct((n_rows, gpix), jnp.float32),
            jax.ShapeDtypeStruct((8, w), jnp.float32),
        ),
        grid_spec=pltpu.PrefetchScalarGridSpec(
            num_scalar_prefetch=0,
            grid=(num_tiles,),
            in_specs=[pl.BlockSpec((tile_rows, w), lambda t: (t, 0)),
                      pl.BlockSpec((tile_rows, w), lambda t: (t, 0)),
                      pl.BlockSpec((w, gpix), lambda t: (0, 0))],   # resident
            out_specs=(
                pl.BlockSpec((tile_rows, gpix), lambda t: (t, 0)),
                pl.BlockSpec((8, w), lambda t: (0, 0)),             # resident
            ),
        ),
        compiler_params=pltpu.CompilerParams(
            dimension_semantics=("arbitrary",)),
    )(p2d, g2d, sel)

    col_sse = jnp.sum(chacc, axis=0)                        # (w,)
    ch_sse = jnp.sum(col_sse.reshape(gpix, n_ch), axis=0)   # (n_ch,)
    return dots.reshape(-1), ch_sse


def _as_prop_rows(x, w):
    flat = jnp.asarray(x, jnp.float32).reshape(-1)
    n = flat.shape[0]
    pad = (-n) % (8 * w)
    if pad:
        # TODO(synk): copy; only when n_pix is not a multiple of 8*Gpix.
        flat = jnp.pad(flat, (0, pad))
    return flat.reshape(-1, w)


# ----------------------------------------------------------------------------
# RenderMetric.forward equivalent: one jitted dispatch, one host transfer.
# ----------------------------------------------------------------------------
@jax.jit
def _render_metric_device(img, gt_img, properties, gt_properties):
    render_mse = _mse(img, gt_img)
    psnr = -10.0 * jnp.log(render_mse) / math.log(10.0)      # mse2psnr
    rmse = jnp.sqrt(render_mse)

    n_ch = properties.shape[-1]
    n_pix = properties.size // n_ch
    gpix = 128 // math.gcd(n_ch, 128)      # pixels per lane-dense row
    w = gpix * n_ch                        # multiple of 128 by construction

    p2d = _as_prop_rows(properties, w)
    g2d = _as_prop_rows(gt_properties, w)

    # (w, gpix) 0/1 selection matrix: column k sums the 3 normal channels of
    # pixel k within a row.  Tiny, built once per trace.
    col = jnp.arange(w)
    pix = jnp.arange(gpix)
    sel = ((col[:, None] // n_ch == pix[None, :])
           & (col[:, None] % n_ch < 3)).astype(jnp.float32)

    dots_flat, ch_sse = _prop_metrics_pallas(p2d, g2d, sel, n_ch, gpix)
    dots = dots_flat[:n_pix]
    # TODO(synk): arccos stays in the jitted wrapper on the small dots vector;
    # in-kernel acos Mosaic lowering is not relied on.
    normal_rre = jnp.mean(jnp.arccos(dots)) / math.pi * 180.0

    armse = jnp.sqrt(jnp.sum(ch_sse[3:6]) / jnp.float32(n_pix * 3))
    rrmse = jnp.sqrt(jnp.sum(ch_sse[6:9]) / jnp.float32(n_pix * 3))
    frmse = jnp.sqrt(jnp.sum(ch_sse[9:]) / jnp.float32(n_pix * (n_ch - 9)))

    return {"psnr": psnr, "rmse": rmse, "normal_rre": normal_rre,
            "armse": armse, "rrmse": rrmse, "frmse": frmse}


def render_metric(img, gt_img, properties, gt_properties):
    dev = _render_metric_device(img, gt_img, properties, gt_properties)
    dev = jax.block_until_ready(dev)
    host = jax.device_get(dev)                 # single transfer for all metrics
    return {k: float(v) for k, v in host.items()}


if __name__ == "__main__":
    key = jax.random.PRNGKey(0)
    k1, k2, k3, k4 = jax.random.split(key, 4)

    B, C, H, W = 2, 3, 16, 16      # rendered image, NCHW
    Cp = 12                        # per-pixel properties (>= 10 channels)

    img = jax.random.uniform(k1, (B, C, H, W), dtype=jnp.float32)
    gt_img = jax.random.uniform(k2, (B, C, H, W), dtype=jnp.float32)

    properties = jax.random.normal(k3, (B, H, W, Cp), dtype=jnp.float32)
    gt_properties = jax.random.normal(k4, (B, H, W, Cp), dtype=jnp.float32)
    # normalize the normal channels (typical input); module still clamps the dot
    properties = properties.at[..., :3].set(
        properties[..., :3]
        / jnp.linalg.norm(properties[..., :3], axis=-1, keepdims=True))
    gt_properties = gt_properties.at[..., :3].set(
        gt_properties[..., :3]
        / jnp.linalg.norm(gt_properties[..., :3], axis=-1, keepdims=True))

    metrics = render_metric(img, gt_img, properties, gt_properties)

    # pure-JAX reference (same semantics as the PyTorch module)
    ref = {}
    mse = jnp.mean((img - gt_img) ** 2)
    ref["psnr"] = float(-10.0 * jnp.log(mse) / math.log(10.0))
    ref["rmse"] = float(jnp.sqrt(mse))
    d = jnp.clip(jnp.sum(properties[..., :3] * gt_properties[..., :3], axis=-1),
                 -1.0, 1.0)
    ref["normal_rre"] = float(jnp.mean(jnp.arccos(d)) / math.pi * 180.0)
    ref["armse"] = float(jnp.sqrt(jnp.mean(
        (properties[..., 3:6] - gt_properties[..., 3:6]) ** 2)))
    ref["rrmse"] = float(jnp.sqrt(jnp.mean(
        (properties[..., 6:9] - gt_properties[..., 6:9]) ** 2)))
    ref["frmse"] = float(jnp.sqrt(jnp.mean(
        (properties[..., 9:] - gt_properties[..., 9:]) ** 2)))

    assert all(math.isfinite(v) for v in metrics.values()), metrics
    for k in ref:
        assert abs(metrics[k] - ref[k]) <= 1e-3 + 2e-3 * abs(ref[k]), \
            (k, metrics[k], ref[k])

    print("KERNEL_OK")
</pallas_src>

<mosaic_0001>
module attributes {stable_mosaic.version = 11 : i64} {
  func.func @kernel(%arg0: i32, %arg1: memref<16x384xf32, #tpu.memory_space<vmem>>, %arg2: memref<16x384xf32, #tpu.memory_space<vmem>>, %arg3: memref<384x32xf32, #tpu.memory_space<vmem>>, %arg4: memref<16x32xf32, #tpu.memory_space<vmem>>, %arg5: memref<8x384xf32, #tpu.memory_space<vmem>>) attributes {dimension_semantics = [#tpu.dimension_semantics<arbitrary>], iteration_bounds = array<i64: 1>, scalar_prefetch = 0 : i64, scratch_operands = 0 : i64, tpu.core_type = #tpu.core_type<tc>, window_params = [{transform_indices = @transform_0, window_bounds = array<i64: 16, 384>}, {transform_indices = @transform_1, window_bounds = array<i64: 16, 384>}, {pipeline_mode = #tpu.pipeline_mode<synchronous>, transform_indices = @transform_2, window_bounds = array<i64: 384, 32>}, {transform_indices = @transform_3, window_bounds = array<i64: 16, 32>}, {pipeline_mode = #tpu.pipeline_mode<synchronous>, transform_indices = @transform_4, window_bounds = array<i64: 8, 384>}]} {
    %c0_i32 = arith.constant 0 : i32
    %0 = arith.cmpi eq, %arg0, %c0_i32 : i32
    %1 = arith.extui %0 : i1 to i32
    %c0_i32_0 = arith.constant 0 : i32
    %2 = arith.cmpi ne, %1, %c0_i32_0 : i32
    scf.if %2 {
      %cst_15 = arith.constant 0.000000e+00 : f32
      %20 = vector.broadcast %cst_15 : f32 to vector<8x384xf32>
      %c0_16 = arith.constant 0 : index
      %c0_17 = arith.constant 0 : index
      %21 = vector.load %arg5[%c0_16, %c0_17] : memref<8x384xf32, #tpu.memory_space<vmem>>, vector<8x384xf32>
      tpu.vector_store %arg5[%c0_16, %c0_17], %20 {strides = array<i32>} : memref<8x384xf32, #tpu.memory_space<vmem>>, vector<8x384xf32>,
    } else {
    }
    %c0 = arith.constant 0 : index
    %c0_1 = arith.constant 0 : index
    %3 = vector.load %arg1[%c0, %c0_1] : memref<16x384xf32, #tpu.memory_space<vmem>>, vector<16x384xf32>
    %c0_2 = arith.constant 0 : index
    %c0_3 = arith.constant 0 : index
    %4 = vector.load %arg2[%c0_2, %c0_3] : memref<16x384xf32, #tpu.memory_space<vmem>>, vector<16x384xf32>
    %5 = arith.subf %3, %4 : vector<16x384xf32>
    %6 = arith.mulf %5, %5 : vector<16x384xf32>
    %c0_4 = arith.constant 0 : index
    %c0_5 = arith.constant 0 : index
    %7 = vector.load %arg5[%c0_4, %c0_5] : memref<8x384xf32, #tpu.memory_space<vmem>>, vector<8x384xf32>
    %8 = vector.shape_cast %6 : vector<16x384xf32> to vector<2x8x384xf32>
    %cst = arith.constant dense<0.000000e+00> : vector<8x384xf32>
    %9 = vector.multi_reduction <add>, %8, %cst [0] : vector<2x8x384xf32> to vector<8x384xf32>
    %10 = arith.addf %7, %9 : vector<8x384xf32>
    %c0_6 = arith.constant 0 : index
    %c0_7 = arith.constant 0 : index
    %11 = vector.load %arg5[%c0_6, %c0_7] : memref<8x384xf32, #tpu.memory_space<vmem>>, vector<8x384xf32>
    tpu.vector_store %arg5[%c0_6, %c0_7], %10 {strides = array<i32>} : memref<8x384xf32, #tpu.memory_space<vmem>>, vector<8x384xf32>,
    %12 = arith.mulf %3, %4 : vector<16x384xf32>
    %c0_8 = arith.constant 0 : index
    %c0_9 = arith.constant 0 : index
    %13 = vector.load %arg3[%c0_8, %c0_9] : memref<384x32xf32, #tpu.memory_space<vmem>>, vector<384x32xf32>
    %cst_10 = arith.constant dense<0.000000e+00> : vector<16x32xf32>
    %14 = tpu.matmul %12, %13, %cst_10 {dimension_numbers = #tpu.dot_dimension_numbers<[1], [0], [0], [1], [0, 0, 1, 1], [], []>, precision = #tpu.contract_precision<fp32>} : vector<16x384xf32>, vector<384x32xf32>, vector<16x32xf32> -> vector<16x32xf32>
    %cst_11 = arith.constant -1.000000e+00 : f32
    %cst_12 = arith.constant 1.000000e+00 : f32
    %15 = vector.broadcast %cst_11 : f32 to vector<16x32xf32>
    %16 = arith.maximumf %15, %14 : vector<16x32xf32>
    %17 = vector.broadcast %cst_12 : f32 to vector<16x32xf32>
    %18 = arith.minimumf %17, %16 : vector<16x32xf32>
    %c0_13 = arith.constant 0 : index
    %c0_14 = arith.constant 0 : index
    %19 = vector.load %arg4[%c0_13, %c0_14] : memref<16x32xf32, #tpu.memory_space<vmem>>, vector<16x32xf32>
    tpu.vector_store %arg4[%c0_13, %c0_14], %18 {strides = array<i32>} : memref<16x32xf32, #tpu.memory_space<vmem>>, vector<16x32xf32>,
    return
  }
  func.func @transform_0(%arg0: i32) -> (i32, i32) {
    %c0_i32 = arith.constant 0 : i32
    %c0_i32_0 = arith.constant 0 : i32
    return %arg0, %c0_i32 : i32, i32
  }
  func.func @transform_1(%arg0: i32) -> (i32, i32) {
    %c0_i32 = arith.constant 0 : i32
    %c0_i32_0 = arith.constant 0 : i32
    return %arg0, %c0_i32 : i32, i32
  }
  func.func @transform_2(%arg0: i32) -> (i32, i32) {
    %c0_i32 = arith.constant 0 : i32
    %c0_i32_0 = arith.constant 0 : i32
    %c0_i32_1 = arith.constant 0 : i32
    return %c0_i32, %c0_i32_0 : i32, i32
  }
  func.func @transform_3(%arg0: i32) -> (i32, i32) {
    %c0_i32 = arith.constant 0 : i32
    %c0_i32_0 = arith.constant 0 : i32
    return %arg0, %c0_i32 : i32, i32
  }
  func.func @transform_4(%arg0: i32) -> (i32, i32) {
    %c0_i32 = arith.constant 0 : i32
    %c0_i32_0 = arith.constant 0 : i32
    %c0_i32_1 = arith.constant 0 : i32
    return %c0_i32, %c0_i32_0 : i32, i32
  }
}

module attributes {stable_mosaic.version = 11 : i64} {
  func.func @kernel(%arg0: i32, %arg1: memref<16x128xf32, #tpu.memory_space<vmem>>, %arg2: memref<16x128xf32, #tpu.memory_space<vmem>>, %arg3: memref<8x128xf32, #tpu.memory_space<vmem>>) attributes {dimension_semantics = [#tpu.dimension_semantics<arbitrary>], iteration_bounds = array<i64: 1>, scalar_prefetch = 0 : i64, scratch_operands = 0 : i64, tpu.core_type = #tpu.core_type<tc>, window_params = [{transform_indices = @transform_0, window_bounds = array<i64: 16, 128>}, {transform_indices = @transform_1, window_bounds = array<i64: 16, 128>}, {pipeline_mode = #tpu.pipeline_mode<synchronous>, transform_indices = @transform_2, window_bounds = array<i64: 8, 128>}]} {
    %c0_i32 = arith.constant 0 : i32
    %0 = arith.cmpi eq, %arg0, %c0_i32 : i32
    %1 = arith.extui %0 : i1 to i32
    %c0_i32_0 = arith.constant 0 : i32
    %2 = arith.cmpi ne, %1, %c0_i32_0 : i32
    scf.if %2 {
      %cst_8 = arith.constant 0.000000e+00 : f32
      %12 = vector.broadcast %cst_8 : f32 to vector<8x128xf32>
      %c0_9 = arith.constant 0 : index
      %c0_10 = arith.constant 0 : index
      %13 = vector.load %arg3[%c0_9, %c0_10] : memref<8x128xf32, #tpu.memory_space<vmem>>, vector<8x128xf32>
      tpu.vector_store %arg3[%c0_9, %c0_10], %12 {strides = array<i32>} : memref<8x128xf32, #tpu.memory_space<vmem>>, vector<8x128xf32>,
    } else {
    }
    %c0 = arith.constant 0 : index
    %c0_1 = arith.constant 0 : index
    %3 = vector.load %arg1[%c0, %c0_1] : memref<16x128xf32, #tpu.memory_space<vmem>>, vector<16x128xf32>
    %c0_2 = arith.constant 0 : index
    %c0_3 = arith.constant 0 : index
    %4 = vector.load %arg2[%c0_2, %c0_3] : memref<16x128xf32, #tpu.memory_space<vmem>>, vector<16x128xf32>
    %5 = arith.subf %3, %4 : vector<16x128xf32>
    %6 = arith.mulf %5, %5 : vector<16x128xf32>
    %c0_4 = arith.constant 0 : index
    %c0_5 = arith.constant 0 : index
    %7 = vector.load %arg3[%c0_4, %c0_5] : memref<8x128xf32, #tpu.memory_space<vmem>>, vector<8x128xf32>
    %8 = vector.shape_cast %6 : vector<16x128xf32> to vector<2x8x128xf32>
    %cst = arith.constant dense<0.000000e+00> : vector<8x128xf32>
    %9 = vector.multi_reduction <add>, %8, %cst [0] : vector<2x8x128xf32> to vector<8x128xf32>
    %10 = arith.addf %7, %9 : vector<8x128xf32>
    %c0_6 = arith.constant 0 : index
    %c0_7 = arith.constant 0 : index
    %11 = vector.load %arg3[%c0_6, %c0_7] : memref<8x128xf32, #tpu.memory_space<vmem>>, vector<8x128xf32>
    tpu.vector_store %arg3[%c0_6, %c0_7], %10 {strides = array<i32>} : memref<8x128xf32, #tpu.memory_space<vmem>>, vector<8x128xf32>,
    return
  }
  func.func @transform_0(%arg0: i32) -> (i32, i32) {
    %c0_i32 = arith.constant 0 : i32
    %c0_i32_0 = arith.constant 0 : i32
    return %arg0, %c0_i32 : i32, i32
  }
  func.func @transform_1(%arg0: i32) -> (i32, i32) {
    %c0_i32 = arith.constant 0 : i32
    %c0_i32_0 = arith.constant 0 : i32
    return %arg0, %c0_i32 : i32, i32
  }
  func.func @transform_2(%arg0: i32) -> (i32, i32) {
    %c0_i32 = arith.constant 0 : i32
    %c0_i32_0 = arith.constant 0 : i32
    %c0_i32_1 = arith.constant 0 : i32
    return %c0_i32, %c0_i32_0 : i32, i32
  }
}

</mosaic_0001>

<llo_original>
// kernel: _render_metric_device.2
$region0: #{_render_metric_device.2}
  #allocation0 [shape = 'u32[]', space=smem, size = 0x4, offset = 0x4, fixed_abs, tag = 'smem constant byte address 0x4 - core index']
  #allocation1 [shape = 'u32[144,128]{1,0:T(1,128)}', space=vmem, size = 0x12000, scoped, tag = 'internal scratch']
  %s0 = inlined_call_operand.vmem [shape: f32[16,128], index: 0, kind: input, shape index: {}]
  %s1 = inlined_call_operand.vmem [shape: f32[16,128], index: 1, kind: input, shape index: {}]
  %s2 = inlined_call_operand.vmem [shape: f32[8,128], index: 2, kind: output, shape index: {}]
  %s3 = sld [smem:[#allocation0]]
  $region22: #{_render_metric_device.2} parent=0
    _
  %s5 = ssub.s32 1, %s3
  %s6 = scalar_select 0, %s5, %s3
  // Predicated region
  $region2: #{_render_metric_device.2} parent=0 // pred_check
    _
  $region3: #{_render_metric_device.2} parent=0 // pred_check_branch
    %8 = sbr.rel (0) target = $region5
  $region4: #{_render_metric_device.2} parent=0 // pred_region
    _
  $region5: #{_render_metric_device.2} parent=0 // pred_fallthru
    _
  // Predicated region
  $region6: #{_render_metric_device.2} parent=0 // pred_check
    _
  $region7: #{_render_metric_device.2} parent=0 // pred_check_branch
    %10 = sbr.rel (0) target = $region9
  $region8: #{_render_metric_device.2} parent=0 // pred_region
    _
  $region9: #{_render_metric_device.2} parent=0 // pred_fallthru
    _
  %p11 = scmp.eq.s32.totalorder 0, 0
  // Predicated region
  $region10: #{_render_metric_device.2} parent=0 // pred_check
    %p12 = pneg %p11
  $region11: #{_render_metric_device.2} parent=0 // pred_check_branch
    %14 = sbr.rel (%p12) target = $region13
  $region12: #{_render_metric_device.2} parent=0 // pred_region
    %15 = vst [vmem:[%s2] sm:$0xff] 0.0
  $region13: #{_render_metric_device.2} parent=0 // pred_fallthru
    _
  %v16 = vld [vmem:[%s0] sm:$0xff]
  %v17 = vld [vmem:[%s0 + $0x8] sm:$0xff]
  %v18 = vld [vmem:[%s1] sm:$0xff]
  %v19 = vld [vmem:[%s1 + $0x8] sm:$0xff]
  %v20 = vsub.f32 %v16, %v18
  %v21 = vsub.f32 %v17, %v19
  %v22 = vmul.f32 %v20, %v20
  %v23 = vmul.f32 %v21, %v21
  %v24 = vld [vmem:[%s2] sm:$0xff]
  %v25 = vadd.f32 %v22, %v23
  %v26 = vadd.f32 %v24, %v25
  %27 = vst [vmem:[%s2] sm:$0xff] %v26
  // Predicated region
  $region14: #{_render_metric_device.2} parent=0 // pred_check
    _
  $region15: #{_render_metric_device.2} parent=0 // pred_check_branch
    %29 = sbr.rel (0) target = $region17
  $region16: #{_render_metric_device.2} parent=0 // pred_region
    _
  $region17: #{_render_metric_device.2} parent=0 // pred_fallthru
    _
  // Predicated region
  $region18: #{_render_metric_device.2} parent=0 // pred_check
    _
  $region19: #{_render_metric_device.2} parent=0 // pred_check_branch
    %31 = sbr.rel (0) target = $region21
  $region20: #{_render_metric_device.2} parent=0 // pred_region
    _
  $region21: #{_render_metric_device.2} parent=0 // pred_fallthru
    _

// kernel: _render_metric_device.3
$region0: #{_render_metric_device.3}
  #allocation0 [shape = 'u32[]', space=smem, size = 0x4, offset = 0x4, fixed_abs, tag = 'smem constant byte address 0x4 - core index']
  #allocation1 [shape = 'u32[144,128]{1,0:T(1,128)}', space=vmem, size = 0x12000, scoped, tag = 'internal scratch']
  %s0 = inlined_call_operand.vmem [shape: f32[16,384], index: 0, kind: input, shape index: {}]
  %s1 = inlined_call_operand.vmem [shape: f32[16,384], index: 1, kind: input, shape index: {}]
  %s2 = inlined_call_operand.vmem [shape: f32[384,32], index: 2, kind: input, shape index: {}]
  %s3 = inlined_call_operand.vmem [shape: f32[16,32], index: 3, kind: output, shape index: {0}]
  %s4 = inlined_call_operand.vmem [shape: f32[8,384], index: 4, kind: output, shape index: {1}]
  %5 = xla_tuple %s3, %s4
  %s6 = sld [smem:[#allocation0]]
  $region34: #{_render_metric_device.3} parent=0
    _
  %s8 = ssub.s32 1, %s6
  %s9 = scalar_select 0, %s8, %s6
  // Predicated region
  $region2: #{_render_metric_device.3} parent=0 // pred_check
    _
  $region3: #{_render_metric_device.3} parent=0 // pred_check_branch
    %11 = sbr.rel (0) target = $region5
  $region4: #{_render_metric_device.3} parent=0 // pred_region
    _
  $region5: #{_render_metric_device.3} parent=0 // pred_fallthru
    _
  // Predicated region
  $region6: #{_render_metric_device.3} parent=0 // pred_check
    _
  $region7: #{_render_metric_device.3} parent=0 // pred_check_branch
    %13 = sbr.rel (0) target = $region9
  $region8: #{_render_metric_device.3} parent=0 // pred_region
    _
  $region9: #{_render_metric_device.3} parent=0 // pred_fallthru
    _
  // Predicated region
  $region10: #{_render_metric_device.3} parent=0 // pred_check
    _
  $region11: #{_render_metric_device.3} parent=0 // pred_check_branch
    %15 = sbr.rel (0) target = $region13
  $region12: #{_render_metric_device.3} parent=0 // pred_region
    _
  $region13: #{_render_metric_device.3} parent=0 // pred_fallthru
    _
  %p16 = scmp.eq.s32.totalorder 0, 0
  // Predicated region
  $region14: #{_render_metric_device.3} parent=0 // pred_check
    %p17 = pneg %p16
  $region15: #{_render_metric_device.3} parent=0 // pred_check_branch
    %19 = sbr.rel (%p17) target = $region17
  $region16: #{_render_metric_device.3} parent=0 // pred_region
    %20 = vst [vmem:[%s4] sm:$0xff] 0.0
    %21 = vst [vmem:[%s4 + $0x8] sm:$0xff] 0.0
    %22 = vst [vmem:[%s4 + $0x10] sm:$0xff] 0.0
  $region17: #{_render_metric_device.3} parent=0 // pred_fallthru
    _
  %v23 = vld [vmem:[%s0] sm:$0xff]
  %v24 = vld [vmem:[%s0 + $0x8] sm:$0xff]
  %v25 = vld [vmem:[%s0 + $0x10] sm:$0xff]
  %v26 = vld [vmem:[%s0 + $0x18] sm:$0xff]
  %v27 = vld [vmem:[%s0 + $0x20] sm:$0xff]
  %v28 = vld [vmem:[%s0 + $0x28] sm:$0xff]
  %v29 = vld [vmem:[%s1] sm:$0xff]
  %v30 = vld [vmem:[%s1 + $0x8] sm:$0xff]
  %v31 = vld [vmem:[%s1 + $0x10] sm:$0xff]
  %v32 = vld [vmem:[%s1 + $0x18] sm:$0xff]
  %v33 = vld [vmem:[%s1 + $0x20] sm:$0xff]
  %v34 = vld [vmem:[%s1 + $0x28] sm:$0xff]
  %v35 = vsub.f32 %v23, %v29
  %v36 = vsub.f32 %v24, %v30
  %v37 = vsub.f32 %v25, %v31
  %v38 = vsub.f32 %v26, %v32
  %v39 = vsub.f32 %v27, %v33
  %v40 = vsub.f32 %v28, %v34
  %v41 = vmul.f32 %v35, %v35
  %v42 = vmul.f32 %v36, %v36
  %v43 = vmul.f32 %v37, %v37
  %v44 = vmul.f32 %v38, %v38
  %v45 = vmul.f32 %v39, %v39
  %v46 = vmul.f32 %v40, %v40
  %v47 = vld [vmem:[%s4] sm:$0xff]
  %v48 = vld [vmem:[%s4 + $0x8] sm:$0xff]
  %v49 = vld [vmem:[%s4 + $0x10] sm:$0xff]
  %v50 = vadd.f32 %v41, %v44
  %v51 = vadd.f32 %v42, %v45
  %v52 = vadd.f32 %v43, %v46
  %v53 = vadd.f32 %v47, %v50
  %v54 = vadd.f32 %v48, %v51
  %v55 = vadd.f32 %v49, %v52
  %56 = vst [vmem:[%s4] sm:$0xff] %v53
  %57 = vst [vmem:[%s4 + $0x8] sm:$0xff] %v54
  %58 = vst [vmem:[%s4 + $0x10] sm:$0xff] %v55
  %v59 = vmul.f32 %v23, %v29
  %v60 = vmul.f32 %v24, %v30
  %v61 = vmul.f32 %v25, %v31
  %v62 = vmul.f32 %v26, %v32
  %v63 = vmul.f32 %v27, %v33
  %v64 = vmul.f32 %v28, %v34
  %v65 = vld [vmem:[%s2] sm:$0xff]
  %v66 = vld [vmem:[%s2 + $0x8] sm:$0xff]
  %v67 = vld [vmem:[%s2 + $0x10] sm:$0xff]
  %v68 = vld [vmem:[%s2 + $0x18] sm:$0xff]
  %v69 = vld [vmem:[%s2 + $0x20] sm:$0xff]
  %v70 = vld [vmem:[%s2 + $0x28] sm:$0xff]
  %v71 = vld [vmem:[%s2 + $0x30] sm:$0xff]
  %v72 = vld [vmem:[%s2 + $0x38] sm:$0xff]
  %v73 = vld [vmem:[%s2 + $0x40] sm:$0xff]
  %v74 = vld [vmem:[%s2 + $0x48] sm:$0xff]
  %v75 = vld [vmem:[%s2 + $0x50] sm:$0xff]
  %v76 = vld [vmem:[%s2 + $0x58] sm:$0xff]
  %v77 = vld [vmem:[%s2 + $0x60] sm:$0xff]
  %v78 = vld [vmem:[%s2 + $0x68] sm:$0xff]
  %v79 = vld [vmem:[%s2 + $0x70] sm:$0xff]
  %v80 = vld [vmem:[%s2 + $0x78] sm:$0xff]
  %v81 = vld [vmem:[%s2 + $0x80] sm:$0xff]
  %v82 = vld [vmem:[%s2 + $0x88] sm:$0xff]
  %v83 = vld [vmem:[%s2 + $0x90] sm:$0xff]
  %v84 = vld [vmem:[%s2 + $0x98] sm:$0xff]
  %v85 = vld [vmem:[%s2 + $0xa0] sm:$0xff]
  %v86 = vld [vmem:[%s2 + $0xa8] sm:$0xff]
  %v87 = vld [vmem:[%s2 + $0xb0] sm:$0xff]
  %v88 = vld [vmem:[%s2 + $0xb8] sm:$0xff]
  %v89 = vld [vmem:[%s2 + $0xc0] sm:$0xff]
  %v90 = vld [vmem:[%s2 + $0xc8] sm:$0xff]
  %v91 = vld [vmem:[%s2 + $0xd0] sm:$0xff]
  %v92 = vld [vmem:[%s2 + $0xd8] sm:$0xff]
  %v93 = vld [vmem:[%s2 + $0xe0] sm:$0xff]
  %v94 = vld [vmem:[%s2 + $0xe8] sm:$0xff]
  %v95 = vld [vmem:[%s2 + $0xf0] sm:$0xff]
  %v96 = vld [vmem:[%s2 + $0xf8] sm:$0xff]
  %v97 = vld [vmem:[%s2 + $0x100] sm:$0xff]
  %v98 = vld [vmem:[%s2 + $0x108] sm:$0xff]
  %v99 = vld [vmem:[%s2 + $0x110] sm:$0xff]
  %v100 = vld [vmem:[%s2 + $0x118] sm:$0xff]
  %v101 = vld [vmem:[%s2 + $0x120] sm:$0xff]
  %v102 = vld [vmem:[%s2 + $0x128] sm:$0xff]
  %v103 = vld [vmem:[%s2 + $0x130] sm:$0xff]
  %v104 = vld [vmem:[%s2 + $0x138] sm:$0xff]
  %v105 = vld [vmem:[%s2 + $0x140] sm:$0xff]
  %v106 = vld [vmem:[%s2 + $0x148] sm:$0xff]
  %v107 = vld [vmem:[%s2 + $0x150] sm:$0xff]
  %v108 = vld [vmem:[%s2 + $0x158] sm:$0xff]
  %v109 = vld [vmem:[%s2 + $0x160] sm:$0xff]
  %v110 = vld [vmem:[%s2 + $0x168] sm:$0xff]
  %v111 = vld [vmem:[%s2 + $0x170] sm:$0xff]
  %v112 = vld [vmem:[%s2 + $0x178] sm:$0xff]
  %113 = vmatprep.subr.mxu0 0.0
  %v114 = vand.u32 %v65, 4294901760
  %115 = vmatpush1.msra.mxu0 %v114
  %116 = vmatprep.subr.mxu0 0.0
  %v117 = vand.u32 %v66, 4294901760
  %118 = vmatpush1.msra.mxu0 %v117
  %119 = vmatprep.subr.mxu0 0.0
  %v120 = vand.u32 %v67, 4294901760
  %121 = vmatpush1.msra.mxu0 %v120
  %122 = vmatprep.subr.mxu0 0.0
  %v123 = vand.u32 %v68, 4294901760
  %124 = vmatpush1.msra.mxu0 %v123
  %125 = vmatprep.subr.mxu0 0.0
  %v126 = vand.u32 %v69, 4294901760
  %127 = vmatpush1.msra.mxu0 %v126
  %128 = vmatprep.subr.mxu0 0.0
  %v129 = vand.u32 %v70, 4294901760
  %130 = vmatpush1.msra.mxu0 %v129
  %131 = vmatprep.subr.mxu0 0.0
  %v132 = vand.u32 %v71, 4294901760
  %133 = vmatpush1.msra.mxu0 %v132
  %134 = vmatprep.subr.mxu0 0.0
  %v135 = vand.u32 %v72, 4294901760
  %136 = vmatpush1.msra.mxu0 %v135
  %137 = vmatprep.subr.mxu0 0.0
  %v138 = vand.u32 %v73, 4294901760
  %139 = vmatpush1.msra.mxu0 %v138
  %140 = vmatprep.subr.mxu0 0.0
  %v141 = vand.u32 %v74, 4294901760
  %142 = vmatpush1.msra.mxu0 %v141
  %143 = vmatprep.subr.mxu0 0.0
  %v144 = vand.u32 %v75, 4294901760
  %145 = vmatpush1.msra.mxu0 %v144
  %146 = vmatprep.subr.mxu0 0.0
  %v147 = vand.u32 %v76, 4294901760
  %148 = vmatpush1.msra.mxu0 %v147
  %149 = vmatprep.subr.mxu0 0.0
  %v150 = vand.u32 %v77, 4294901760
  %151 = vmatpush1.msra.mxu0 %v150
  %152 = vmatprep.subr.mxu0 0.0
  %v153 = vand.u32 %v78, 4294901760
  %154 = vmatpush1.msra.mxu0 %v153
  %155 = vmatprep.subr.mxu0 0.0
  %v156 = vand.u32 %v79, 4294901760
  %157 = vmatpush1.msra.mxu0 %v156
  %158 = vmatprep.subr.mxu0 0.0
  %v159 = vand.u32 %v80, 4294901760
  %160 = vmatpush1.msra.mxu0 %v159
  %161 = vmatprep.subr.mxu0 0.0
  %v162 = vand.u32 %v81, 4294901760
  %163 = vmatpush1.msra.mxu0 %v162
  %164 = vmatprep.subr.mxu0 0.0
  %v165 = vand.u32 %v82, 4294901760
  %166 = vmatpush1.msra.mxu0 %v165
  %167 = vmatprep.subr.mxu0 0.0
  %v168 = vand.u32 %v83, 4294901760
  %169 = vmatpush1.msra.mxu0 %v168
  %170 = vmatprep.subr.mxu0 0.0
  %v171 = vand.u32 %v84, 4294901760
  %172 = vmatpush1.msra.mxu0 %v171
  %173 = vmatprep.subr.mxu0 0.0
  %v174 = vand.u32 %v85, 4294901760
  %175 = vmatpush1.msra.mxu0 %v174
  %176 = vmatprep.subr.mxu0 0.0
  %v177 = vand.u32 %v86, 4294901760
  %178 = vmatpush1.msra.mxu0 %v177
  %179 = vmatprep.subr.mxu0 0.0
  %v180 = vand.u32 %v87, 4294901760
  %181 = vmatpush1.msra.mxu0 %v180
  %182 = vmatprep.subr.mxu0 0.0
  %v183 = vand.u32 %v88, 4294901760
  %184 = vmatpush1.msra.mxu0 %v183
  %185 = vmatprep.subr.mxu0 0.0
  %v186 = vand.u32 %v89, 4294901760
  %187 = vmatpush1.msra.mxu0 %v186
  %188 = vmatprep.subr.mxu0 0.0
  %v189 = vand.u32 %v90, 4294901760
  %190 = vmatpush1.msra.mxu0 %v189
  %191 = vmatprep.subr.mxu0 0.0
  %v192 = vand.u32 %v91, 4294901760
  %193 = vmatpush1.msra.mxu0 %v192
  %194 = vmatprep.subr.mxu0 0.0
  %v195 = vand.u32 %v92, 4294901760
  %196 = vmatpush1.msra.mxu0 %v195
  %197 = vmatprep.subr.mxu0 0.0
  %v198 = vand.u32 %v93, 4294901760
  %199 = vmatpush1.msra.mxu0 %v198
  %200 = vmatprep.subr.mxu0 0.0
  %v201 = vand.u32 %v94, 4294901760
  %202 = vmatpush1.msra.mxu0 %v201
  %203 = vmatprep.subr.mxu0 0.0
  %v204 = vand.u32 %v95, 4294901760
  %205 = vmatpush1.msra.mxu0 %v204
  %206 = vmatprep.subr.mxu0 0.0
  %v207 = vand.u32 %v96, 4294901760
  %208 = vmatpush1.msra.mxu0 %v207
  %v209 = vand.u32 %v60, 4294901760
  %v210 = vsub.f32 %v60, %v209
  %v211 = vand.u32 %v210, 4294901760
  %v212 = vsub.f32 %v210, %v211
  %v213 = vand.u32 %v212, 4294901760
  %214 = vmatprep.mubr.f32.mxu0 %v213
  %v215 = vand.u32 %v59, 4294901760
  %v216 = vsub.f32 %v59, %v215
  %v217 = vand.u32 %v216, 4294901760
  %v218 = vsub.f32 %v216, %v217
  %v219 = vand.u32 %v218, 4294901760
  %220 = vmatmul.mubr.f32.gmra.mrb[0].mxu0 %v219
  %v221 = vpop.f32.mrb[0].mxu0
  %v222 = vadd.f32 0.0, %v221
  %v223 = vpop.f32.mrb[0].mxu0
  %v224 = vand.u32 %v63, 4294901760
  %v225 = vsub.f32 %v63, %v224
  %v226 = vand.u32 %v225, 4294901760
  %v227 = vsub.f32 %v225, %v226
  %v228 = vand.u32 %v227, 4294901760
  %229 = vmatprep.mubr.f32.mxu0 %v228
  %v230 = vand.u32 %v62, 4294901760
  %v231 = vsub.f32 %v62, %v230
  %v232 = vand.u32 %v231, 4294901760
  %v233 = vsub.f32 %v231, %v232
  %v234 = vand.u32 %v233, 4294901760
  %235 = vmatmul.mubr.f32.gmra.mrb[0].mxu0 %v234
  %v236 = vpop.f32.mrb[0].mxu0
  %v237 = vadd.f32 0.0, %v236
  %v238 = vpop.f32.mrb[0].mxu0
  %239 = vdwg.mxu0
  %240 = vmatprep.subr.mxu0 0.0
  %v241 = vand.u32 %v65, 4294901760
  %v242 = vsub.f32 %v65, %v241
  %v243 = vand.u32 %v242, 4294901760
  %v244 = vsub.f32 %v242, %v243
  %v245 = vand.u32 %v244, 4294901760
  %246 = vmatpush1.msra.mxu0 %v245
  %247 = vmatprep.subr.mxu0 0.0
  %v248 = vand.u32 %v66, 4294901760
  %v249 = vsub.f32 %v66, %v248
  %v250 = vand.u32 %v249, 4294901760
  %v251 = vsub.f32 %v249, %v250
  %v252 = vand.u32 %v251, 4294901760
  %253 = vmatpush1.msra.mxu0 %v252
  %254 = vmatprep.subr.mxu0 0.0
  %v255 = vand.u32 %v67, 4294901760
  %v256 = vsub.f32 %v67, %v255
  %v257 = vand.u32 %v256, 4294901760
  %v258 = vsub.f32 %v256, %v257
  %v259 = vand.u32 %v258, 4294901760
  %260 = vmatpush1.msra.mxu0 %v259
  %261 = vmatprep.subr.mxu0 0.0
  %v262 = vand.u32 %v68, 4294901760
  %v263 = vsub.f32 %v68, %v262
  %v264 = vand.u32 %v263, 4294901760
  %v265 = vsub.f32 %v263, %v264
  %v266 = vand.u32 %v265, 4294901760
  %267 = vmatpush1.msra.mxu0 %v266
  %268 = vmatprep.subr.mxu0 0.0
  %v269 = vand.u32 %v69, 4294901760
  %v270 = vsub.f32 %v69, %v269
  %v271 = vand.u32 %v270, 4294901760
  %v272 = vsub.f32 %v270, %v271
  %v273 = vand.u32 %v272, 4294901760
  %274 = vmatpush1.msra.mxu0 %v273
  %275 = vmatprep.subr.mxu0 0.0
  %v276 = vand.u32 %v70, 4294901760
  %v277 = vsub.f32 %v70, %v276
  %v278 = vand.u32 %v277, 4294901760
  %v279 = vsub.f32 %v277, %v278
  %v280 = vand.u32 %v279, 4294901760
  %281 = vmatpush1.msra.mxu0 %v280
  %282 = vmatprep.subr.mxu0 0.0
  %v283 = vand.u32 %v71, 4294901760
  %v284 = vsub.f32 %v71, %v283
  %v285 = vand.u32 %v284, 4294901760
  %v286 = vsub.f32 %v284, %v285
  %v287 = vand.u32 %v286, 4294901760
  %288 = vmatpush1.msra.mxu0 %v287
  %289 = vmatprep.subr.mxu0 0.0
  %v290 = vand.u32 %v72, 4294901760
  %v291 = vsub.f32 %v72, %v290
  %v292 = vand.u32 %v291, 4294901760
  %v293 = vsub.f32 %v291, %v292
  %v294 = vand.u32 %v293, 4294901760
  %295 = vmatpush1.msra.mxu0 %v294
  %296 = vmatprep.subr.mxu0 0.0
  %v297 = vand.u32 %v73, 4294901760
  %v298 = vsub.f32 %v73, %v297
  %v299 = vand.u32 %v298, 4294901760
  %v300 = vsub.f32 %v298, %v299
  %v301 = vand.u32 %v300, 4294901760
  %302 = vmatpush1.msra.mxu0 %v301
  %303 = vmatprep.subr.mxu0 0.0
  %v304 = vand.u32 %v74, 4294901760
  %v305 = vsub.f32 %v74, %v304
  %v306 = vand.u32 %v305, 4294901760
  %v307 = vsub.f32 %v305, %v306
  %v308 = vand.u32 %v307, 4294901760
  %309 = vmatpush1.msra.mxu0 %v308
  %310 = vmatprep.subr.mxu0 0.0
  %v311 = vand.u32 %v75, 4294901760
  %v312 = vsub.f32 %v75, %v311
  %v313 = vand.u32 %v312, 4294901760
  %v314 = vsub.f32 %v312, %v313
  %v315 = vand.u32 %v314, 4294901760
  %316 = vmatpush1.msra.mxu0 %v315
  %317 = vmatprep.subr.mxu0 0.0
  %v318 = vand.u32 %v76, 4294901760
  %v319 = vsub.f32 %v76, %v318
  %v320 = vand.u32 %v319, 4294901760
  %v321 = vsub.f32 %v319, %v320
  %v322 = vand.u32 %v321, 4294901760
  %323 = vmatpush1.msra.mxu0 %v322
  %324 = vmatprep.subr.mxu0 0.0
  %v325 = vand.u32 %v77, 4294901760
  %v326 = vsub.f32 %v77, %v325
  %v327 = vand.u32 %v326, 4294901760
  %v328 = vsub.f32 %v326, %v327
  %v329 = vand.u32 %v328, 4294901760
  %330 = vmatpush1.msra.mxu0 %v329
  %331 = vmatprep.subr.mxu0 0.0
  %v332 = vand.u32 %v78, 4294901760
  %v333 = vsub.f32 %v78, %v332
  %v334 = vand.u32 %v333, 4294901760
  %v335 = vsub.f32 %v333, %v334
  %v336 = vand.u32 %v335, 4294901760
  %337 = vmatpush1.msra.mxu0 %v336
  %338 = vmatprep.subr.mxu0 0.0
  %v339 = vand.u32 %v79, 4294901760
  %v340 = vsub.f32 %v79, %v339
  %v341 = vand.u32 %v340, 4294901760
  %v342 = vsub.f32 %v340, %v341
  %v343 = vand.u32 %v342, 4294901760
  %344 = vmatpush1.msra.mxu0 %v343
  %345 = vmatprep.subr.mxu0 0.0
  %v346 = vand.u32 %v80, 4294901760
  %v347 = vsub.f32 %v80, %v346
  %v348 = vand.u32 %v347, 4294901760
  %v349 = vsub.f32 %v347, %v348
  %v350 = vand.u32 %v349, 4294901760
  %351 = vmatpush1.msra.mxu0 %v350
  %352 = vmatprep.subr.mxu0 0.0
  %v353 = vand.u32 %v81, 4294901760
  %v354 = vsub.f32 %v81, %v353
  %v355 = vand.u32 %v354, 4294901760
  %v356 = vsub.f32 %v354, %v355
  %v357 = vand.u32 %v356, 4294901760
  %358 = vmatpush1.msra.mxu0 %v357
  %359 = vmatprep.subr.mxu0 0.0
  %v360 = vand.u32 %v82, 4294901760
  %v361 = vsub.f32 %v82, %v360
  %v362 = vand.u32 %v361, 4294901760
  %v363 = vsub.f32 %v361, %v362
  %v364 = vand.u32 %v363, 4294901760
  %365 = vmatpush1.msra.mxu0 %v364
  %366 = vmatprep.subr.mxu0 0.0
  %v367 = vand.u32 %v83, 4294901760
  %v368 = vsub.f32 %v83, %v367
  %v369 = vand.u32 %v368, 4294901760
  %v370 = vsub.f32 %v368, %v369
  %v371 = vand.u32 %v370, 4294901760
  %372 = vmatpush1.msra.mxu0 %v371
  %373 = vmatprep.subr.mxu0 0.0
  %v374 = vand.u32 %v84, 4294901760
  %v375 = vsub.f32 %v84, %v374
  %v376 = vand.u32 %v375, 4294901760
  %v377 = vsub.f32 %v375, %v376
  %v378 = vand.u32 %v377, 4294901760
  %379 = vmatpush1.msra.mxu0 %v378
  %380 = vmatprep.subr.mxu0 0.0
  %v381 = vand.u32 %v85, 4294901760
  %v382 = vsub.f32 %v85, %v381
  %v383 = vand.u32 %v382, 4294901760
  %v384 = vsub.f32 %v382, %v383
  %v385 = vand.u32 %v384, 4294901760
  %386 = vmatpush1.msra.mxu0 %v385
  %387 = vmatprep.subr.mxu0 0.0
  %v388 = vand.u32 %v86, 4294901760
  %v389 = vsub.f32 %v86, %v388
  %v390 = vand.u32 %v389, 4294901760
  %v391 = vsub.f32 %v389, %v390
  %v392 = vand.u32 %v391, 4294901760
  %393 = vmatpush1.msra.mxu0 %v392
  %394 = vmatprep.subr.mxu0 0.0
  %v395 = vand.u32 %v87, 4294901760
  %v396 = vsub.f32 %v87, %v395
  %v397 = vand.u32 %v396, 4294901760
  %v398 = vsub.f32 %v396, %v397
  %v399 = vand.u32 %v398, 4294901760
  %400 = vmatpush1.msra.mxu0 %v399
  %401 = vmatprep.subr.mxu0 0.0
  %v402 = vand.u32 %v88, 4294901760
  %v403 = vsub.f32 %v88, %v402
  %v404 = vand.u32 %v403, 4294901760
  %v405 = vsub.f32 %v403, %v404
  %v406 = vand.u32 %v405, 4294901760
  %407 = vmatpush1.msra.mxu0 %v406
  %408 = vmatprep.subr.mxu0 0.0
  %v409 = vand.u32 %v89, 4294901760
  %v410 = vsub.f32 %v89, %v409
  %v411 = vand.u32 %v410, 4294901760
  %v412 = vsub.f32 %v410, %v411
  %v413 = vand.u32 %v412, 4294901760
  %414 = vmatpush1.msra.mxu0 %v413
  %415 = vmatprep.subr.mxu0 0.0
  %v416 = vand.u32 %v90, 4294901760
  %v417 = vsub.f32 %v90, %v416
  %v418 = vand.u32 %v417, 4294901760
  %v419 = vsub.f32 %v417, %v418
  %v420 = vand.u32 %v419, 4294901760
  %421 = vmatpush1.msra.mxu0 %v420
  %422 = vmatprep.subr.mxu0 0.0
  %v423 = vand.u32 %v91, 4294901760
  %v424 = vsub.f32 %v91, %v423
  %v425 = vand.u32 %v424, 4294901760
  %v426 = vsub.f32 %v424, %v425
  %v427 = vand.u32 %v426, 4294901760
  %428 = vmatpush1.msra.mxu0 %v427
  %429 = vmatprep.subr.mxu0 0.0
  %v430 = vand.u32 %v92, 4294901760
  %v431 = vsub.f32 %v92, %v430
  %v432 = vand.u32 %v431, 4294901760
  %v433 = vsub.f32 %v431, %v432
  %v434 = vand.u32 %v433, 4294901760
  %435 = vmatpush1.msra.mxu0 %v434
  %436 = vmatprep.subr.mxu0 0.0
  %v437 = vand.u32 %v93, 4294901760
  %v438 = vsub.f32 %v93, %v437
  %v439 = vand.u32 %v438, 4294901760
  %v440 = vsub.f32 %v438, %v439
  %v441 = vand.u32 %v440, 4294901760
  %442 = vmatpush1.msra.mxu0 %v441
  %443 = vmatprep.subr.mxu0 0.0
  %v444 = vand.u32 %v94, 4294901760
  %v445 = vsub.f32 %v94, %v444
  %v446 = vand.u32 %v445, 4294901760
  %v447 = vsub.f32 %v445, %v446
  %v448 = vand.u32 %v447, 4294901760
  %449 = vmatpush1.msra.mxu0 %v448
  %450 = vmatprep.subr.mxu0 0.0
  %v451 = vand.u32 %v95, 4294901760
  %v452 = vsub.f32 %v95, %v451
  %v453 = vand.u32 %v452, 4294901760
  %v454 = vsub.f32 %v452, %v453
  %v455 = vand.u32 %v454, 4294901760
  %456 = vmatpush1.msra.mxu0 %v455
  %457 = vmatprep.subr.mxu0 0.0
  %v458 = vand.u32 %v96, 4294901760
  %v459 = vsub.f32 %v96, %v458
  %v460 = vand.u32 %v459, 4294901760
  %v461 = vsub.f32 %v459, %v460
  %v462 = vand.u32 %v461, 4294901760
  %463 = vmatpush1.msra.mxu0 %v462
  %v464 = vand.u32 %v60, 4294901760
  %465 = vmatprep.mubr.f32.mxu0 %v464
  %v466 = vand.u32 %v59, 4294901760
  %467 = vmatmul.mubr.f32.gmra.mrb[0].mxu0 %v466
  %v468 = vpop.f32.mrb[0].mxu0
  %v469 = vadd.f32 %v222, %v468
  %v470 = vpop.f32.mrb[0].mxu0
  %v471 = vand.u32 %v63, 4294901760
  %472 = vmatprep.mubr.f32.mxu0 %v471
  %v473 = vand.u32 %v62, 4294901760
  %474 = vmatmul.mubr.f32.gmra.mrb[0].mxu0 %v473
  %v475 = vpop.f32.mrb[0].mxu0
  %v476 = vadd.f32 %v237, %v475
  %v477 = vpop.f32.mrb[0].mxu0
  %478 = vdwg.mxu0
  %479 = vmatprep.subr.mxu0 0.0
  %v480 = vand.u32 %v65, 4294901760
  %v481 = vsub.f32 %v65, %v480
  %482 = vmatpush1.msra.mxu0 %v481
  %483 = vmatprep.subr.mxu0 0.0
  %v484 = vand.u32 %v66, 4294901760
  %v485 = vsub.f32 %v66, %v484
  %486 = vmatpush1.msra.mxu0 %v485
  %487 = vmatprep.subr.mxu0 0.0
  %v488 = vand.u32 %v67, 4294901760
  %v489 = vsub.f32 %v67, %v488
  %490 = vmatpush1.msra.mxu0 %v489
  %491 = vmatprep.subr.mxu0 0.0
  %v492 = vand.u32 %v68, 4294901760
  %v493 = vsub.f32 %v68, %v492
  %494 = vmatpush1.msra.mxu0 %v493
  %495 = vmatprep.subr.mxu0 0.0
  %v496 = vand.u32 %v69, 4294901760
  %v497 = vsub.f32 %v69, %v496
  %498 = vmatpush1.msra.mxu0 %v497
  %499 = vmatprep.subr.mxu0 0.0
  %v500 = vand.u32 %v70, 4294901760
  %v501 = vsub.f32 %v70, %v500
  %502 = vmatpush1.msra.mxu0 %v501
  %503 = vmatprep.subr.mxu0 0.0
  %v504 = vand.u32 %v71, 4294901760
  %v505 = vsub.f32 %v71, %v504
  %506 = vmatpush1.msra.mxu0 %v505
  %507 = vmatprep.subr.mxu0 0.0
  %v508 = vand.u32 %v72, 4294901760
  %v509 = vsub.f32 %v72, %v508
  %510 = vmatpush1.msra.mxu0 %v509
  %511 = vmatprep.subr.mxu0 0.0
  %v512 = vand.u32 %v73, 4294901760
  %v513 = vsub.f32 %v73, %v512
  %514 = vmatpush1.msra.mxu0 %v513
  %515 = vmatprep.subr.mxu0 0.0
  %v516 = vand.u32 %v74, 4294901760
  %v517 = vsub.f32 %v74, %v516
  %518 = vmatpush1.msra.mxu0 %v517
  %519 = vmatprep.subr.mxu0 0.0
  %v520 = vand.u32 %v75, 4294901760
  %v521 = vsub.f32 %v75, %v520
  %522 = vmatpush1.msra.mxu0 %v521
  %523 = vmatprep.subr.mxu0 0.0
  %v524 = vand.u32 %v76, 4294901760
  %v525 = vsub.f32 %v76, %v524
  %526 = vmatpush1.msra.mxu0 %v525
  %527 = vmatprep.subr.mxu0 0.0
  %v528 = vand.u32 %v77, 4294901760
  %v529 = vsub.f32 %v77, %v528
  %530 = vmatpush1.msra.mxu0 %v529
  %531 = vmatprep.subr.mxu0 0.0
  %v532 = vand.u32 %v78, 4294901760
  %v533 = vsub.f32 %v78, %v532
  %534 = vmatpush1.msra.mxu0 %v533
  %535 = vmatprep.subr.mxu0 0.0
  %v536 = vand.u32 %v79, 4294901760
  %v537 = vsub.f32 %v79, %v536
  %538 = vmatpush1.msra.mxu0 %v537
  %539 = vmatprep.subr.mxu0 0.0
  %v540 = vand.u32 %v80, 4294901760
  %v541 = vsub.f32 %v80, %v540
  %542 = vmatpush1.msra.mxu0 %v541
  %543 = vmatprep.subr.mxu0 0.0
  %v544 = vand.u32 %v81, 4294901760
  %v545 = vsub.f32 %v81, %v544
  %546 = vmatpush1.msra.mxu0 %v545
  %547 = vmatprep.subr.mxu0 0.0
  %v548 = vand.u32 %v82, 4294901760
  %v549 = vsub.f32 %v82, %v548
  %550 = vmatpush1.msra.mxu0 %v549
  %551 = vmatprep.subr.mxu0 0.0
  %v552 = vand.u32 %v83, 4294901760
  %v553 = vsub.f32 %v83, %v552
  %554 = vmatpush1.msra.mxu0 %v553
  %555 = vmatprep.subr.mxu0 0.0
  %v556 = vand.u32 %v84, 4294901760
  %v557 = vsub.f32 %v84, %v556
  %558 = vmatpush1.msra.mxu0 %v557
  %559 = vmatprep.subr.mxu0 0.0
  %v560 = vand.u32 %v85, 4294901760
  %v561 = vsub.f32 %v85, %v560
  %562 = vmatpush1.msra.mxu0 %v561
  %563 = vmatprep.subr.mxu0 0.0
  %v564 = vand.u32 %v86, 4294901760
  %v565 = vsub.f32 %v86, %v564
  %566 = vmatpush1.msra.mxu0 %v565
  %567 = vmatprep.subr.mxu0 0.0
  %v568 = vand.u32 %v87, 4294901760
  %v569 = vsub.f32 %v87, %v568
  %570 = vmatpush1.msra.mxu0 %v569
  %571 = vmatprep.subr.mxu0 0.0
  %v572 = vand.u32 %v88, 4294901760
  %v573 = vsub.f32 %v88, %v572
  %574 = vmatpush1.msra.mxu0 %v573
  %575 = vmatprep.subr.mxu0 0.0
  %v576 = vand.u32 %v89, 4294901760
  %v577 = vsub.f32 %v89, %v576
  %578 = vmatpush1.msra.mxu0 %v577
  %579 = vmatprep.subr.mxu0 0.0
  %v580 = vand.u32 %v90, 4294901760
  %v581 = vsub.f32 %v90, %v580
  %582 = vmatpush1.msra.mxu0 %v581
  %583 = vmatprep.subr.mxu0 0.0
  %v584 = vand.u32 %v91, 4294901760
  %v585 = vsub.f32 %v91, %v584
  %586 = vmatpush1.msra.mxu0 %v585
  %587 = vmatprep.subr.mxu0 0.0
  %v588 = vand.u32 %v92, 4294901760
  %v589 = vsub.f32 %v92, %v588
  %590 = vmatpush1.msra.mxu0 %v589
  %591 = vmatprep.subr.mxu0 0.0
  %v592 = vand.u32 %v93, 4294901760
  %v593 = vsub.f32 %v93, %v592
  %594 = vmatpush1.msra.mxu0 %v593
  %595 = vmatprep.subr.mxu0 0.0
  %v596 = vand.u32 %v94, 4294901760
  %v597 = vsub.f32 %v94, %v596
  %598 = vmatpush1.msra.mxu0 %v597
  %599 = vmatprep.subr.mxu0 0.0
  %v600 = vand.u32 %v95, 4294901760
  %v601 = vsub.f32 %v95, %v600
  %602 = vmatpush1.msra.mxu0 %v601
  %603 = vmatprep.subr.mxu0 0.0
  %v604 = vand.u32 %v96, 4294901760
  %v605 = vsub.f32 %v96, %v604
  %606 = vmatpush1.msra.mxu0 %v605
  %v607 = vand.u32 %v60, 4294901760
  %v608 = vsub.f32 %v60, %v607
  %609 = vmatprep.mubr.f32.mxu0 %v608
  %v610 = vand.u32 %v59, 4294901760
  %v611 = vsub.f32 %v59, %v610
  %612 = vmatmul.mubr.f32.gmra.mrb[0].mxu0 %v611
  %v613 = vpop.f32.mrb[0].mxu0
  %v614 = vadd.f32 %v469, %v613
  %v615 = vpop.f32.mrb[0].mxu0
  %v616 = vand.u32 %v63, 4294901760
  %v617 = vsub.f32 %v63, %v616
  %618 = vmatprep.mubr.f32.mxu0 %v617
  %v619 = vand.u32 %v62, 4294901760
  %v620 = vsub.f32 %v62, %v619
  %621 = vmatmul.mubr.f32.gmra.mrb[0].mxu0 %v620
  %v622 = vpop.f32.mrb[0].mxu0
  %v623 = vadd.f32 %v476, %v622
  %v624 = vpop.f32.mrb[0].mxu0
  %625 = vdwg.mxu0
  %626 = vmatprep.subr.mxu0 0.0
  %v627 = vand.u32 %v65, 4294901760
  %628 = vmatpush1.msra.mxu0 %v627
  %629 = vmatprep.subr.mxu0 0.0
  %v630 = vand.u32 %v66, 4294901760
  %631 = vmatpush1.msra.mxu0 %v630
  %632 = vmatprep.subr.mxu0 0.0
  %v633 = vand.u32 %v67, 4294901760
  %634 = vmatpush1.msra.mxu0 %v633
  %635 = vmatprep.subr.mxu0 0.0
  %v636 = vand.u32 %v68, 4294901760
  %637 = vmatpush1.msra.mxu0 %v636
  %638 = vmatprep.subr.mxu0 0.0
  %v639 = vand.u32 %v69, 4294901760
  %640 = vmatpush1.msra.mxu0 %v639
  %641 = vmatprep.subr.mxu0 0.0
  %v642 = vand.u32 %v70, 4294901760
  %643 = vmatpush1.msra.mxu0 %v642
  %644 = vmatprep.subr.mxu0 0.0
  %v645 = vand.u32 %v71, 4294901760
  %646 = vmatpush1.msra.mxu0 %v645
  %647 = vmatprep.subr.mxu0 0.0
  %v648 = vand.u32 %v72, 4294901760
  %649 = vmatpush1.msra.mxu0 %v648
  %650 = vmatprep.subr.mxu0 0.0
  %v651 = vand.u32 %v73, 4294901760
  %652 = vmatpush1.msra.mxu0 %v651
  %653 = vmatprep.subr.mxu0 0.0
  %v654 = vand.u32 %v74, 4294901760
  %655 = vmatpush1.msra.mxu0 %v654
  %656 = vmatprep.subr.mxu0 0.0
  %v657 = vand.u32 %v75, 4294901760
  %658 = vmatpush1.msra.mxu0 %v657
  %659 = vmatprep.subr.mxu0 0.0
  %v660 = vand.u32 %v76, 4294901760
  %661 = vmatpush1.msra.mxu0 %v660
  %662 = vmatprep.subr.mxu0 0.0
  %v663 = vand.u32 %v77, 4294901760
  %664 = vmatpush1.msra.mxu0 %v663
  %665 = vmatprep.subr.mxu0 0.0
  %v666 = vand.u32 %v78, 4294901760
  %667 = vmatpush1.msra.mxu0 %v666
  %668 = vmatprep.subr.mxu0 0.0
  %v669 = vand.u32 %v79, 4294901760
  %670 = vmatpush1.msra.mxu0 %v669
  %671 = vmatprep.subr.mxu0 0.0
  %v672 = vand.u32 %v80, 4294901760
  %673 = vmatpush1.msra.mxu0 %v672
  %674 = vmatprep.subr.mxu0 0.0
  %v675 = vand.u32 %v81, 4294901760
  %676 = vmatpush1.msra.mxu0 %v675
  %677 = vmatprep.subr.mxu0 0.0
  %v678 = vand.u32 %v82, 4294901760
  %679 = vmatpush1.msra.mxu0 %v678
  %680 = vmatprep.subr.mxu0 0.0
  %v681 = vand.u32 %v83, 4294901760
  %682 = vmatpush1.msra.mxu0 %v681
  %683 = vmatprep.subr.mxu0 0.0
  %v684 = vand.u32 %v84, 4294901760
  %685 = vmatpush1.msra.mxu0 %v684
  %686 = vmatprep.subr.mxu0 0.0
  %v687 = vand.u32 %v85, 4294901760
  %688 = vmatpush1.msra.mxu0 %v687
  %689 = vmatprep.subr.mxu0 0.0
  %v690 = vand.u32 %v86, 4294901760
  %691 = vmatpush1.msra.mxu0 %v690
  %692 = vmatprep.subr.mxu0 0.0
  %v693 = vand.u32 %v87, 4294901760
  %694 = vmatpush1.msra.mxu0 %v693
  %695 = vmatprep.subr.mxu0 0.0
  %v696 = vand.u32 %v88, 4294901760
  %697 = vmatpush1.msra.mxu0 %v696
  %698 = vmatprep.subr.mxu0 0.0
  %v699 = vand.u32 %v89, 4294901760
  %700 = vmatpush1.msra.mxu0 %v699
  %701 = vmatprep.subr.mxu0 0.0
  %v702 = vand.u32 %v90, 4294901760
  %703 = vmatpush1.msra.mxu0 %v702
  %704 = vmatprep.subr.mxu0 0.0
  %v705 = vand.u32 %v91, 4294901760
  %706 = vmatpush1.msra.mxu0 %v705
  %707 = vmatprep.subr.mxu0 0.0
  %v708 = vand.u32 %v92, 4294901760
  %709 = vmatpush1.msra.mxu0 %v708
  %710 = vmatprep.subr.mxu0 0.0
  %v711 = vand.u32 %v93, 4294901760
  %712 = vmatpush1.msra.mxu0 %v711
  %713 = vmatprep.subr.mxu0 0.0
  %v714 = vand.u32 %v94, 4294901760
  %715 = vmatpush1.msra.mxu0 %v714
  %716 = vmatprep.subr.mxu0 0.0
  %v717 = vand.u32 %v95, 4294901760
  %718 = vmatpush1.msra.mxu0 %v717
  %719 = vmatprep.subr.mxu0 0.0
  %v720 = vand.u32 %v96, 4294901760
  %721 = vmatpush1.msra.mxu0 %v720
  %v722 = vand.u32 %v60, 4294901760
  %v723 = vsub.f32 %v60, %v722
  %v724 = vand.u32 %v723, 4294901760
  %725 = vmatprep.mubr.f32.mxu0 %v724
  %v726 = vand.u32 %v59, 4294901760
  %v727 = vsub.f32 %v59, %v726
  %v728 = vand.u32 %v727, 4294901760
  %729 = vmatmul.mubr.f32.gmra.mrb[0].mxu0 %v728
  %v730 = vpop.f32.mrb[0].mxu0
  %v731 = vadd.f32 %v614, %v730
  %v732 = vpop.f32.mrb[0].mxu0
  %v733 = vand.u32 %v63, 4294901760
  %v734 = vsub.f32 %v63, %v733
  %v735 = vand.u32 %v734, 4294901760
  %736 = vmatprep.mubr.f32.mxu0 %v735
  %v737 = vand.u32 %v62, 4294901760
  %v738 = vsub.f32 %v62, %v737
  %v739 = vand.u32 %v738, 4294901760
  %740 = vmatmul.mubr.f32.gmra.mrb[0].mxu0 %v739
  %v741 = vpop.f32.mrb[0].mxu0
  %v742 = vadd.f32 %v623, %v741
  %v743 = vpop.f32.mrb[0].mxu0
  %744 = vdwg.mxu0
  %745 = vmatprep.subr.mxu0 0.0
  %v746 = vand.u32 %v65, 4294901760
  %v747 = vsub.f32 %v65, %v746
  %v748 = vand.u32 %v747, 4294901760
  %749 = vmatpush1.msra.mxu0 %v748
  %750 = vmatprep.subr.mxu0 0.0
  %v751 = vand.u32 %v66, 4294901760
  %v752 = vsub.f32 %v66, %v751
  %v753 = vand.u32 %v752, 4294901760
  %754 = vmatpush1.msra.mxu0 %v753
  %755 = vmatprep.subr.mxu0 0.0
  %v756 = vand.u32 %v67, 4294901760
  %v757 = vsub.f32 %v67, %v756
  %v758 = vand.u32 %v757, 4294901760
  %759 = vmatpush1.msra.mxu0 %v758
  %760 = vmatprep.subr.mxu0 0.0
  %v761 = vand.u32 %v68, 4294901760
  %v762 = vsub.f32 %v68, %v761
  %v763 = vand.u32 %v762, 4294901760
  %764 = vmatpush1.msra.mxu0 %v763
  %765 = vmatprep.subr.mxu0 0.0
  %v766 = vand.u32 %v69, 4294901760
  %v767 = vsub.f32 %v69, %v766
  %v768 = vand.u32 %v767, 4294901760
  %769 = vmatpush1.msra.mxu0 %v768
  %770 = vmatprep.subr.mxu0 0.0
  %v771 = vand.u32 %v70, 4294901760
  %v772 = vsub.f32 %v70, %v771
  %v773 = vand.u32 %v772, 4294901760
  %774 = vmatpush1.msra.mxu0 %v773
  %775 = vmatprep.subr.mxu0 0.0
  %v776 = vand.u32 %v71, 4294901760
  %v777 = vsub.f32 %v71, %v776
  %v778 = vand.u32 %v777, 4294901760
  %779 = vmatpush1.msra.mxu0 %v778
  %780 = vmatprep.subr.mxu0 0.0
  %v781 = vand.u32 %v72, 4294901760
  %v782 = vsub.f32 %v72, %v781
  %v783 = vand.u32 %v782, 4294901760
  %784 = vmatpush1.msra.mxu0 %v783
  %785 = vmatprep.subr.mxu0 0.0
  %v786 = vand.u32 %v73, 4294901760
  %v787 = vsub.f32 %v73, %v786
  %v788 = vand.u32 %v787, 4294901760
  %789 = vmatpush1.msra.mxu0 %v788
  %790 = vmatprep.subr.mxu0 0.0
  %v791 = vand.u32 %v74, 4294901760
  %v792 = vsub.f32 %v74, %v791
  %v793 = vand.u32 %v792, 4294901760
  %794 = vmatpush1.msra.mxu0 %v793
  %795 = vmatprep.subr.mxu0 0.0
  %v796 = vand.u32 %v75, 4294901760
  %v797 = vsub.f32 %v75, %v796
  %v798 = vand.u32 %v797, 4294901760
  %799 = vmatpush1.msra.mxu0 %v798
  %800 = vmatprep.subr.mxu0 0.0
  %v801 = vand.u32 %v76, 4294901760
  %v802 = vsub.f32 %v76, %v801
  %v803 = vand.u32 %v802, 4294901760
  %804 = vmatpush1.msra.mxu0 %v803
  %805 = vmatprep.subr.mxu0 0.0
  %v806 = vand.u32 %v77, 4294901760
  %v807 = vsub.f32 %v77, %v806
  %v808 = vand.u32 %v807, 4294901760
  %809 = vmatpush1.msra.mxu0 %v808
  %810 = vmatprep.subr.mxu0 0.0
  %v811 = vand.u32 %v78, 4294901760
  %v812 = vsub.f32 %v78, %v811
  %v813 = vand.u32 %v812, 4294901760
  %814 = vmatpush1.msra.mxu0 %v813
  %815 = vmatprep.subr.mxu0 0.0
  %v816 = vand.u32 %v79, 4294901760
  %v817 = vsub.f32 %v79, %v816
  %v818 = vand.u32 %v817, 4294901760
  %819 = vmatpush1.msra.mxu0 %v818
  %820 = vmatprep.subr.mxu0 0.0
  %v821 = vand.u32 %v80, 4294901760
  %v822 = vsub.f32 %v80, %v821
  %v823 = vand.u32 %v822, 4294901760
  %824 = vmatpush1.msra.mxu0 %v823
  %825 = vmatprep.subr.mxu0 0.0
  %v826 = vand.u32 %v81, 4294901760
  %v827 = vsub.f32 %v81, %v826
  %v828 = vand.u32 %v827, 4294901760
  %829 = vmatpush1.msra.mxu0 %v828
  %830 = vmatprep.subr.mxu0 0.0
  %v831 = vand.u32 %v82, 4294901760
  %v832 = vsub.f32 %v82, %v831
  %v833 = vand.u32 %v832, 4294901760
  %834 = vmatpush1.msra.mxu0 %v833
  %835 = vmatprep.subr.mxu0 0.0
  %v836 = vand.u32 %v83, 4294901760
  %v837 = vsub.f32 %v83, %v836
  %v838 = vand.u32 %v837, 4294901760
  %839 = vmatpush1.msra.mxu0 %v838
  %840 = vmatprep.subr.mxu0 0.0
  %v841 = vand.u32 %v84, 4294901760
  %v842 = vsub.f32 %v84, %v841
  %v843 = vand.u32 %v842, 4294901760
  %844 = vmatpush1.msra.mxu0 %v843
  %845 = vmatprep.subr.mxu0 0.0
  %v846 = vand.u32 %v85, 4294901760
  %v847 = vsub.f32 %v85, %v846
  %v848 = vand.u32 %v847, 4294901760
  %849 = vmatpush1.msra.mxu0 %v848
  %850 = vmatprep.subr.mxu0 0.0
  %v851 = vand.u32 %v86, 4294901760
  %v852 = vsub.f32 %v86, %v851
  %v853 = vand.u32 %v852, 4294901760
  %854 = vmatpush1.msra.mxu0 %v853
  %855 = vmatprep.subr.mxu0 0.0
  %v856 = vand.u32 %v87, 4294901760
  %v857 = vsub.f32 %v87, %v856
  %v858 = vand.u32 %v857, 4294901760
  %859 = vmatpush1.msra.mxu0 %v858
  %860 = vmatprep.subr.mxu0 0.0
  %v861 = vand.u32 %v88, 4294901760
  %v862 = vsub.f32 %v88, %v861
  %v863 = vand.u32 %v862, 4294901760
  %864 = vmatpush1.msra.mxu0 %v863
  %865 = vmatprep.subr.mxu0 0.0
  %v866 = vand.u32 %v89, 4294901760
  %v867 = vsub.f32 %v89, %v866
  %v868 = vand.u32 %v867, 4294901760
  %869 = vmatpush1.msra.mxu0 %v868
  %870 = vmatprep.subr.mxu0 0.0
  %v871 = vand.u32 %v90, 4294901760
  %v872 = vsub.f32 %v90, %v871
  %v873 = vand.u32 %v872, 4294901760
  %874 = vmatpush1.msra.mxu0 %v873
  %875 = vmatprep.subr.mxu0 0.0
  %v876 = vand.u32 %v91, 4294901760
  %v877 = vsub.f32 %v91, %v876
  %v878 = vand.u32 %v877, 4294901760
  %879 = vmatpush1.msra.mxu0 %v878
  %880 = vmatprep.subr.mxu0 0.0
  %v881 = vand.u32 %v92, 4294901760
  %v882 = vsub.f32 %v92, %v881
  %v883 = vand.u32 %v882, 4294901760
  %884 = vmatpush1.msra.mxu0 %v883
  %885 = vmatprep.subr.mxu0 0.0
  %v886 = vand.u32 %v93, 4294901760
  %v887 = vsub.f32 %v93, %v886
  %v888 = vand.u32 %v887, 4294901760
  %889 = vmatpush1.msra.mxu0 %v888
  %890 = vmatprep.subr.mxu0 0.0
  %v891 = vand.u32 %v94, 4294901760
  %v892 = vsub.f32 %v94, %v891
  %v893 = vand.u32 %v892, 4294901760
  %894 = vmatpush1.msra.mxu0 %v893
  %895 = vmatprep.subr.mxu0 0.0
  %v896 = vand.u32 %v95, 4294901760
  %v897 = vsub.f32 %v95, %v896
  %v898 = vand.u32 %v897, 4294901760
  %899 = vmatpush1.msra.mxu0 %v898
  %900 = vmatprep.subr.mxu0 0.0
  %v901 = vand.u32 %v96, 4294901760
  %v902 = vsub.f32 %v96, %v901
  %v903 = vand.u32 %v902, 4294901760
  %904 = vmatpush1.msra.mxu0 %v903
  %v905 = vand.u32 %v60, 4294901760
  %906 = vmatprep.mubr.f32.mxu0 %v905
  %v907 = vand.u32 %v59, 4294901760
  %908 = vmatmul.mubr.f32.gmra.mrb[0].mxu0 %v907
  %v909 = vpop.f32.mrb[0].mxu0
  %v910 = vadd.f32 %v731, %v909
  %v911 = vpop.f32.mrb[0].mxu0
  %v912 = vand.u32 %v63, 4294901760
  %913 = vmatprep.mubr.f32.mxu0 %v912
  %v914 = vand.u32 %v62, 4294901760
  %915 = vmatmul.mubr.f32.gmra.mrb[0].mxu0 %v914
  %v916 = vpop.f32.mrb[0].mxu0
  %v917 = vadd.f32 %v742, %v916
  %v918 = vpop.f32.mrb[0].mxu0
  %919 = vdwg.mxu0
  %920 = vmatprep.subr.mxu0 0.0
  %v921 = vand.u32 %v65, 4294901760
  %922 = vmatpush1.msra.mxu0 %v921
  %923 = vmatprep.subr.mxu0 0.0
  %v924 = vand.u32 %v66, 4294901760
  %925 = vmatpush1.msra.mxu0 %v924
  %926 = vmatprep.subr.mxu0 0.0
  %v927 = vand.u32 %v67, 4294901760
  %928 = vmatpush1.msra.mxu0 %v927
  %929 = vmatprep.subr.mxu0 0.0
  %v930 = vand.u32 %v68, 4294901760
  %931 = vmatpush1.msra.mxu0 %v930
  %932 = vmatprep.subr.mxu0 0.0
  %v933 = vand.u32 %v69, 4294901760
  %934 = vmatpush1.msra.mxu0 %v933
  %935 = vmatprep.subr.mxu0 0.0
  %v936 = vand.u32 %v70, 4294901760
  %937 = vmatpush1.msra.mxu0 %v936
  %938 = vmatprep.subr.mxu0 0.0
  %v939 = vand.u32 %v71, 4294901760
  %940 = vmatpush1.msra.mxu0 %v939
  %941 = vmatprep.subr.mxu0 0.0
  %v942 = vand.u32 %v72, 4294901760
  %943 = vmatpush1.msra.mxu0 %v942
  %944 = vmatprep.subr.mxu0 0.0
  %v945 = vand.u32 %v73, 4294901760
  %946 = vmatpush1.msra.mxu0 %v945
  %947 = vmatprep.subr.mxu0 0.0
  %v948 = vand.u32 %v74, 4294901760
  %949 = vmatpush1.msra.mxu0 %v948
  %950 = vmatprep.subr.mxu0 0.0
  %v951 = vand.u32 %v75, 4294901760
  %952 = vmatpush1.msra.mxu0 %v951
  %953 = vmatprep.subr.mxu0 0.0
  %v954 = vand.u32 %v76, 4294901760
  %955 = vmatpush1.msra.mxu0 %v954
  %956 = vmatprep.subr.mxu0 0.0
  %v957 = vand.u32 %v77, 4294901760
  %958 = vmatpush1.msra.mxu0 %v957
  %959 = vmatprep.subr.mxu0 0.0
  %v960 = vand.u32 %v78, 4294901760
  %961 = vmatpush1.msra.mxu0 %v960
  %962 = vmatprep.subr.mxu0 0.0
  %v963 = vand.u32 %v79, 4294901760
  %964 = vmatpush1.msra.mxu0 %v963
  %965 = vmatprep.subr.mxu0 0.0
  %v966 = vand.u32 %v80, 4294901760
  %967 = vmatpush1.msra.mxu0 %v966
  %968 = vmatprep.subr.mxu0 0.0
  %v969 = vand.u32 %v81, 4294901760
  %970 = vmatpush1.msra.mxu0 %v969
  %971 = vmatprep.subr.mxu0 0.0
  %v972 = vand.u32 %v82, 4294901760
  %973 = vmatpush1.msra.mxu0 %v972
  %974 = vmatprep.subr.mxu0 0.0
  %v975 = vand.u32 %v83, 4294901760
  %976 = vmatpush1.msra.mxu0 %v975
  %977 = vmatprep.subr.mxu0 0.0
  %v978 = vand.u32 %v84, 4294901760
  %979 = vmatpush1.msra.mxu0 %v978
  %980 = vmatprep.subr.mxu0 0.0
  %v981 = vand.u32 %v85, 4294901760
  %982 = vmatpush1.msra.mxu0 %v981
  %983 = vmatprep.subr.mxu0 0.0
  %v984 = vand.u32 %v86, 4294901760
  %985 = vmatpush1.msra.mxu0 %v984
  %986 = vmatprep.subr.mxu0 0.0
  %v987 = vand.u32 %v87, 4294901760
  %988 = vmatpush1.msra.mxu0 %v987
  %989 = vmatprep.subr.mxu0 0.0
  %v990 = vand.u32 %v88, 4294901760
  %991 = vmatpush1.msra.mxu0 %v990
  %992 = vmatprep.subr.mxu0 0.0
  %v993 = vand.u32 %v89, 4294901760
  %994 = vmatpush1.msra.mxu0 %v993
  %995 = vmatprep.subr.mxu0 0.0
  %v996 = vand.u32 %v90, 4294901760
  %997 = vmatpush1.msra.mxu0 %v996
  %998 = vmatprep.subr.mxu0 0.0
  %v999 = vand.u32 %v91, 4294901760
  %1000 = vmatpush1.msra.mxu0 %v999
  %1001 = vmatprep.subr.mxu0 0.0
  %v1002 = vand.u32 %v92, 4294901760
  %1003 = vmatpush1.msra.mxu0 %v1002
  %1004 = vmatprep.subr.mxu0 0.0
  %v1005 = vand.u32 %v93, 4294901760
  %1006 = vmatpush1.msra.mxu0 %v1005
  %1007 = vmatprep.subr.mxu0 0.0
  %v1008 = vand.u32 %v94, 4294901760
  %1009 = vmatpush1.msra.mxu0 %v1008
  %1010 = vmatprep.subr.mxu0 0.0
  %v1011 = vand.u32 %v95, 4294901760
  %1012 = vmatpush1.msra.mxu0 %v1011
  %1013 = vmatprep.subr.mxu0 0.0
  %v1014 = vand.u32 %v96, 4294901760
  %1015 = vmatpush1.msra.mxu0 %v1014
  %v1016 = vand.u32 %v60, 4294901760
  %1017 = vmatprep.mubr.f32.mxu0 %v1016
  %v1018 = vand.u32 %v59, 4294901760
  %1019 = vmatmul.mubr.f32.gmra.mrb[0].mxu0 %v1018
  %v1020 = vpop.f32.mrb[0].mxu0
  %v1021 = vadd.f32 %v910, %v1020
  %v1022 = vpop.f32.mrb[0].mxu0
  %v1023 = vand.u32 %v63, 4294901760
  %1024 = vmatprep.mubr.f32.mxu0 %v1023
  %v1025 = vand.u32 %v62, 4294901760
  %1026 = vmatmul.mubr.f32.gmra.mrb[0].mxu0 %v1025
  %v1027 = vpop.f32.mrb[0].mxu0
  %v1028 = vadd.f32 %v917, %v1027
  %v1029 = vpop.f32.mrb[0].mxu0
  %1030 = vdwg.mxu0
  %1031 = vmatprep.subr.mxu0 0.0
  %v1032 = vand.u32 %v97, 4294901760
  %1033 = vmatpush1.msra.mxu0 %v1032
  %1034 = vmatprep.subr.mxu0 0.0
  %v1035 = vand.u32 %v98, 4294901760
  %1036 = vmatpush1.msra.mxu0 %v1035
  %1037 = vmatprep.subr.mxu0 0.0
  %v1038 = vand.u32 %v99, 4294901760
  %1039 = vmatpush1.msra.mxu0 %v1038
  %1040 = vmatprep.subr.mxu0 0.0
  %v1041 = vand.u32 %v100, 4294901760
  %1042 = vmatpush1.msra.mxu0 %v1041
  %1043 = vmatprep.subr.mxu0 0.0
  %v1044 = vand.u32 %v101, 4294901760
  %1045 = vmatpush1.msra.mxu0 %v1044
  %1046 = vmatprep.subr.mxu0 0.0
  %v1047 = vand.u32 %v102, 4294901760
  %1048 = vmatpush1.msra.mxu0 %v1047
  %1049 = vmatprep.subr.mxu0 0.0
  %v1050 = vand.u32 %v103, 4294901760
  %1051 = vmatpush1.msra.mxu0 %v1050
  %1052 = vmatprep.subr.mxu0 0.0
  %v1053 = vand.u32 %v104, 4294901760
  %1054 = vmatpush1.msra.mxu0 %v1053
  %1055 = vmatprep.subr.mxu0 0.0
  %v1056 = vand.u32 %v105, 4294901760
  %1057 = vmatpush1.msra.mxu0 %v1056
  %1058 = vmatprep.subr.mxu0 0.0
  %v1059 = vand.u32 %v106, 4294901760
  %1060 = vmatpush1.msra.mxu0 %v1059
  %1061 = vmatprep.subr.mxu0 0.0
  %v1062 = vand.u32 %v107, 4294901760
  %1063 = vmatpush1.msra.mxu0 %v1062
  %1064 = vmatprep.subr.mxu0 0.0
  %v1065 = vand.u32 %v108, 4294901760
  %1066 = vmatpush1.msra.mxu0 %v1065
  %1067 = vmatprep.subr.mxu0 0.0
  %v1068 = vand.u32 %v109, 4294901760
  %1069 = vmatpush1.msra.mxu0 %v1068
  %1070 = vmatprep.subr.mxu0 0.0
  %v1071 = vand.u32 %v110, 4294901760
  %1072 = vmatpush1.msra.mxu0 %v1071
  %1073 = vmatprep.subr.mxu0 0.0
  %v1074 = vand.u32 %v111, 4294901760
  %1075 = vmatpush1.msra.mxu0 %v1074
  %1076 = vmatprep.subr.mxu0 0.0
  %v1077 = vand.u32 %v112, 4294901760
  %1078 = vmatpush1.msra.mxu0 %v1077
  %1079 = vmatprep.subr.mxu0 0.0
  %1080 = vmatpush1.msra.mxu0 0.0
  %1081 = vmatprep.subr.mxu0 0.0
  %1082 = vmatpush1.msra.mxu0 0.0
  %1083 = vmatprep.subr.mxu0 0.0
  %1084 = vmatpush1.msra.mxu0 0.0
  %1085 = vmatprep.subr.mxu0 0.0
  %1086 = vmatpush1.msra.mxu0 0.0
  %1087 = vmatprep.subr.mxu0 0.0
  %1088 = vmatpush1.msra.mxu0 0.0
  %1089 = vmatprep.subr.mxu0 0.0
  %1090 = vmatpush1.msra.mxu0 0.0
  %1091 = vmatprep.subr.mxu0 0.0
  %1092 = vmatpush1.msra.mxu0 0.0
  %1093 = vmatprep.subr.mxu0 0.0
  %1094 = vmatpush1.msra.mxu0 0.0
  %1095 = vmatprep.subr.mxu0 0.0
  %1096 = vmatpush1.msra.mxu0 0.0
  %1097 = vmatprep.subr.mxu0 0.0
  %1098 = vmatpush1.msra.mxu0 0.0
  %1099 = vmatprep.subr.mxu0 0.0
  %1100 = vmatpush1.msra.mxu0 0.0
  %1101 = vmatprep.subr.mxu0 0.0
  %1102 = vmatpush1.msra.mxu0 0.0
  %1103 = vmatprep.subr.mxu0 0.0
  %1104 = vmatpush1.msra.mxu0 0.0
  %1105 = vmatprep.subr.mxu0 0.0
  %1106 = vmatpush1.msra.mxu0 0.0
  %1107 = vmatprep.subr.mxu0 0.0
  %1108 = vmatpush1.msra.mxu0 0.0
  %1109 = vmatprep.subr.mxu0 0.0
  %1110 = vmatpush1.msra.mxu0 0.0
  %1111 = vmatprep.mubr.f32.mxu0 0.0
  %v1112 = vand.u32 %v61, 4294901760
  %v1113 = vsub.f32 %v61, %v1112
  %v1114 = vand.u32 %v1113, 4294901760
  %v1115 = vsub.f32 %v1113, %v1114
  %v1116 = vand.u32 %v1115, 4294901760
  %1117 = vmatmul.mubr.f32.gmra.mrb[0].mxu0 %v1116
  %v1118 = vpop.f32.mrb[0].mxu0
  %v1119 = vadd.f32 %v1021, %v1118
  %v1120 = vpop.f32.mrb[0].mxu0
  %1121 = vmatprep.mubr.f32.mxu0 0.0
  %v1122 = vand.u32 %v64, 4294901760
  %v1123 = vsub.f32 %v64, %v1122
  %v1124 = vand.u32 %v1123, 4294901760
  %v1125 = vsub.f32 %v1123, %v1124
  %v1126 = vand.u32 %v1125, 4294901760
  %1127 = vmatmul.mubr.f32.gmra.mrb[0].mxu0 %v1126
  %v1128 = vpop.f32.mrb[0].mxu0
  %v1129 = vadd.f32 %v1028, %v1128
  %v1130 = vpop.f32.mrb[0].mxu0
  %1131 = vdwg.mxu0
  %1132 = vmatprep.subr.mxu0 0.0
  %v1133 = vand.u32 %v97, 4294901760
  %v1134 = vsub.f32 %v97, %v1133
  %v1135 = vand.u32 %v1134, 4294901760
  %v1136 = vsub.f32 %v1134, %v1135
  %v1137 = vand.u32 %v1136, 4294901760
  %1138 = vmatpush1.msra.mxu0 %v1137
  %1139 = vmatprep.subr.mxu0 0.0
  %v1140 = vand.u32 %v98, 4294901760
  %v1141 = vsub.f32 %v98, %v1140
  %v1142 = vand.u32 %v1141, 4294901760
  %v1143 = vsub.f32 %v1141, %v1142
  %v1144 = vand.u32 %v1143, 4294901760
  %1145 = vmatpush1.msra.mxu0 %v1144
  %1146 = vmatprep.subr.mxu0 0.0
  %v1147 = vand.u32 %v99, 4294901760
  %v1148 = vsub.f32 %v99, %v1147
  %v1149 = vand.u32 %v1148, 4294901760
  %v1150 = vsub.f32 %v1148, %v1149
  %v1151 = vand.u32 %v1150, 4294901760
  %1152 = vmatpush1.msra.mxu0 %v1151
  %1153 = vmatprep.subr.mxu0 0.0
  %v1154 = vand.u32 %v100, 4294901760
  %v1155 = vsub.f32 %v100, %v1154
  %v1156 = vand.u32 %v1155, 4294901760
  %v1157 = vsub.f32 %v1155, %v1156
  %v1158 = vand.u32 %v1157, 4294901760
  %1159 = vmatpush1.msra.mxu0 %v1158
  %1160 = vmatprep.subr.mxu0 0.0
  %v1161 = vand.u32 %v101, 4294901760
  %v1162 = vsub.f32 %v101, %v1161
  %v1163 = vand.u32 %v1162, 4294901760
  %v1164 = vsub.f32 %v1162, %v1163
  %v1165 = vand.u32 %v1164, 4294901760
  %1166 = vmatpush1.msra.mxu0 %v1165
  %1167 = vmatprep.subr.mxu0 0.0
  %v1168 = vand.u32 %v102, 4294901760
  %v1169 = vsub.f32 %v102, %v1168
  %v1170 = vand.u32 %v1169, 4294901760
  %v1171 = vsub.f32 %v1169, %v1170
  %v1172 = vand.u32 %v1171, 4294901760
  %1173 = vmatpush1.msra.mxu0 %v1172
  %1174 = vmatprep.subr.mxu0 0.0
  %v1175 = vand.u32 %v103, 4294901760
  %v1176 = vsub.f32 %v103, %v1175
  %v1177 = vand.u32 %v1176, 4294901760
  %v1178 = vsub.f32 %v1176, %v1177
  %v1179 = vand.u32 %v1178, 4294901760
  %1180 = vmatpush1.msra.mxu0 %v1179
  %1181 = vmatprep.subr.mxu0 0.0
  %v1182 = vand.u32 %v104, 4294901760
  %v1183 = vsub.f32 %v104, %v1182
  %v1184 = vand.u32 %v1183, 4294901760
  %v1185 = vsub.f32 %v1183, %v1184
  %v1186 = vand.u32 %v1185, 4294901760
  %1187 = vmatpush1.msra.mxu0 %v1186
  %1188 = vmatprep.subr.mxu0 0.0
  %v1189 = vand.u32 %v105, 4294901760
  %v1190 = vsub.f32 %v105, %v1189
  %v1191 = vand.u32 %v1190, 4294901760
  %v1192 = vsub.f32 %v1190, %v1191
  %v1193 = vand.u32 %v1192, 4294901760
  %1194 = vmatpush1.msra.mxu0 %v1193
  %1195 = vmatprep.subr.mxu0 0.0
  %v1196 = vand.u32 %v106, 4294901760
  %v1197 = vsub.f32 %v106, %v1196
  %v1198 = vand.u32 %v1197, 4294901760
  %v1199 = vsub.f32 %v1197, %v1198
  %v1200 = vand.u32 %v1199, 4294901760
  %1201 = vmatpush1.msra.mxu0 %v1200
  %1202 = vmatprep.subr.mxu0 0.0
  %v1203 = vand.u32 %v107, 4294901760
  %v1204 = vsub.f32 %v107, %v1203
  %v1205 = vand.u32 %v1204, 4294901760
  %v1206 = vsub.f32 %v1204, %v1205
  %v1207 = vand.u32 %v1206, 4294901760
  %1208 = vmatpush1.msra.mxu0 %v1207
  %1209 = vmatprep.subr.mxu0 0.0
  %v1210 = vand.u32 %v108, 4294901760
  %v1211 = vsub.f32 %v108, %v1210
  %v1212 = vand.u32 %v1211, 4294901760
  %v1213 = vsub.f32 %v1211, %v1212
  %v1214 = vand.u32 %v1213, 4294901760
  %1215 = vmatpush1.msra.mxu0 %v1214
  %1216 = vmatprep.subr.mxu0 0.0
  %v1217 = vand.u32 %v109, 4294901760
  %v1218 = vsub.f32 %v109, %v1217
  %v1219 = vand.u32 %v1218, 4294901760
  %v1220 = vsub.f32 %v1218, %v1219
  %v1221 = vand.u32 %v1220, 4294901760
  %1222 = vmatpush1.msra.mxu0 %v1221
  %1223 = vmatprep.subr.mxu0 0.0
  %v1224 = vand.u32 %v110, 4294901760
  %v1225 = vsub.f32 %v110, %v1224
  %v1226 = vand.u32 %v1225, 4294901760
  %v1227 = vsub.f32 %v1225, %v1226
  %v1228 = vand.u32 %v1227, 4294901760
  %1229 = vmatpush1.msra.mxu0 %v1228
  %1230 = vmatprep.subr.mxu0 0.0
  %v1231 = vand.u32 %v111, 4294901760
  %v1232 = vsub.f32 %v111, %v1231
  %v1233 = vand.u32 %v1232, 4294901760
  %v1234 = vsub.f32 %v1232, %v1233
  %v1235 = vand.u32 %v1234, 4294901760
  %1236 = vmatpush1.msra.mxu0 %v1235
  %1237 = vmatprep.subr.mxu0 0.0
  %v1238 = vand.u32 %v112, 4294901760
  %v1239 = vsub.f32 %v112, %v1238
  %v1240 = vand.u32 %v1239, 4294901760
  %v1241 = vsub.f32 %v1239, %v1240
  %v1242 = vand.u32 %v1241, 4294901760
  %1243 = vmatpush1.msra.mxu0 %v1242
  %1244 = vmatprep.subr.mxu0 0.0
  %1245 = vmatpush1.msra.mxu0 0.0
  %1246 = vmatprep.subr.mxu0 0.0
  %1247 = vmatpush1.msra.mxu0 0.0
  %1248 = vmatprep.subr.mxu0 0.0
  %1249 = vmatpush1.msra.mxu0 0.0
  %1250 = vmatprep.subr.mxu0 0.0
  %1251 = vmatpush1.msra.mxu0 0.0
  %1252 = vmatprep.subr.mxu0 0.0
  %1253 = vmatpush1.msra.mxu0 0.0
  %1254 = vmatprep.subr.mxu0 0.0
  %1255 = vmatpush1.msra.mxu0 0.0
  %1256 = vmatprep.subr.mxu0 0.0
  %1257 = vmatpush1.msra.mxu0 0.0
  %1258 = vmatprep.subr.mxu0 0.0
  %1259 = vmatpush1.msra.mxu0 0.0
  %1260 = vmatprep.subr.mxu0 0.0
  %1261 = vmatpush1.msra.mxu0 0.0
  %1262 = vmatprep.subr.mxu0 0.0
  %1263 = vmatpush1.msra.mxu0 0.0
  %1264 = vmatprep.subr.mxu0 0.0
  %1265 = vmatpush1.msra.mxu0 0.0
  %1266 = vmatprep.subr.mxu0 0.0
  %1267 = vmatpush1.msra.mxu0 0.0
  %1268 = vmatprep.subr.mxu0 0.0
  %1269 = vmatpush1.msra.mxu0 0.0
  %1270 = vmatprep.subr.mxu0 0.0
  %1271 = vmatpush1.msra.mxu0 0.0
  %1272 = vmatprep.subr.mxu0 0.0
  %1273 = vmatpush1.msra.mxu0 0.0
  %1274 = vmatprep.subr.mxu0 0.0
  %1275 = vmatpush1.msra.mxu0 0.0
  %1276 = vmatprep.mubr.f32.mxu0 0.0
  %v1277 = vand.u32 %v61, 4294901760
  %1278 = vmatmul.mubr.f32.gmra.mrb[0].mxu0 %v1277
  %v1279 = vpop.f32.mrb[0].mxu0
  %v1280 = vadd.f32 %v1119, %v1279
  %v1281 = vpop.f32.mrb[0].mxu0
  %1282 = vmatprep.mubr.f32.mxu0 0.0
  %v1283 = vand.u32 %v64, 4294901760
  %1284 = vmatmul.mubr.f32.gmra.mrb[0].mxu0 %v1283
  %v1285 = vpop.f32.mrb[0].mxu0
  %v1286 = vadd.f32 %v1129, %v1285
  %v1287 = vpop.f32.mrb[0].mxu0
  %1288 = vdwg.mxu0
  %1289 = vmatprep.subr.mxu0 0.0
  %v1290 = vand.u32 %v97, 4294901760
  %v1291 = vsub.f32 %v97, %v1290
  %1292 = vmatpush1.msra.mxu0 %v1291
  %1293 = vmatprep.subr.mxu0 0.0
  %v1294 = vand.u32 %v98, 4294901760
  %v1295 = vsub.f32 %v98, %v1294
  %1296 = vmatpush1.msra.mxu0 %v1295
  %1297 = vmatprep.subr.mxu0 0.0
  %v1298 = vand.u32 %v99, 4294901760
  %v1299 = vsub.f32 %v99, %v1298
  %1300 = vmatpush1.msra.mxu0 %v1299
  %1301 = vmatprep.subr.mxu0 0.0
  %v1302 = vand.u32 %v100, 4294901760
  %v1303 = vsub.f32 %v100, %v1302
  %1304 = vmatpush1.msra.mxu0 %v1303
  %1305 = vmatprep.subr.mxu0 0.0
  %v1306 = vand.u32 %v101, 4294901760
  %v1307 = vsub.f32 %v101, %v1306
  %1308 = vmatpush1.msra.mxu0 %v1307
  %1309 = vmatprep.subr.mxu0 0.0
  %v1310 = vand.u32 %v102, 4294901760
  %v1311 = vsub.f32 %v102, %v1310
  %1312 = vmatpush1.msra.mxu0 %v1311
  %1313 = vmatprep.subr.mxu0 0.0
  %v1314 = vand.u32 %v103, 4294901760
  %v1315 = vsub.f32 %v103, %v1314
  %1316 = vmatpush1.msra.mxu0 %v1315
  %1317 = vmatprep.subr.mxu0 0.0
  %v1318 = vand.u32 %v104, 4294901760
  %v1319 = vsub.f32 %v104, %v1318
  %1320 = vmatpush1.msra.mxu0 %v1319
  %1321 = vmatprep.subr.mxu0 0.0
  %v1322 = vand.u32 %v105, 4294901760
  %v1323 = vsub.f32 %v105, %v1322
  %1324 = vmatpush1.msra.mxu0 %v1323
  %1325 = vmatprep.subr.mxu0 0.0
  %v1326 = vand.u32 %v106, 4294901760
  %v1327 = vsub.f32 %v106, %v1326
  %1328 = vmatpush1.msra.mxu0 %v1327
  %1329 = vmatprep.subr.mxu0 0.0
  %v1330 = vand.u32 %v107, 4294901760
  %v1331 = vsub.f32 %v107, %v1330
  %1332 = vmatpush1.msra.mxu0 %v1331
  %1333 = vmatprep.subr.mxu0 0.0
  %v1334 = vand.u32 %v108, 4294901760
  %v1335 = vsub.f32 %v108, %v1334
  %1336 = vmatpush1.msra.mxu0 %v1335
  %1337 = vmatprep.subr.mxu0 0.0
  %v1338 = vand.u32 %v109, 4294901760
  %v1339 = vsub.f32 %v109, %v1338
  %1340 = vmatpush1.msra.mxu0 %v1339
  %1341 = vmatprep.subr.mxu0 0.0
  %v1342 = vand.u32 %v110, 4294901760
  %v1343 = vsub.f32 %v110, %v1342
  %1344 = vmatpush1.msra.mxu0 %v1343
  %1345 = vmatprep.subr.mxu0 0.0
  %v1346 = vand.u32 %v111, 4294901760
  %v1347 = vsub.f32 %v111, %v1346
  %1348 = vmatpush1.msra.mxu0 %v1347
  %1349 = vmatprep.subr.mxu0 0.0
  %v1350 = vand.u32 %v112, 4294901760
  %v1351 = vsub.f32 %v112, %v1350
  %1352 = vmatpush1.msra.mxu0 %v1351
  %1353 = vmatprep.subr.mxu0 0.0
  %1354 = vmatpush1.msra.mxu0 0.0
  %1355 = vmatprep.subr.mxu0 0.0
  %1356 = vmatpush1.msra.mxu0 0.0
  %1357 = vmatprep.subr.mxu0 0.0
  %1358 = vmatpush1.msra.mxu0 0.0
  %1359 = vmatprep.subr.mxu0 0.0
  %1360 = vmatpush1.msra.mxu0 0.0
  %1361 = vmatprep.subr.mxu0 0.0
  %1362 = vmatpush1.msra.mxu0 0.0
  %1363 = vmatprep.subr.mxu0 0.0
  %1364 = vmatpush1.msra.mxu0 0.0
  %1365 = vmatprep.subr.mxu0 0.0
  %1366 = vmatpush1.msra.mxu0 0.0
  %1367 = vmatprep.subr.mxu0 0.0
  %1368 = vmatpush1.msra.mxu0 0.0
  %1369 = vmatprep.subr.mxu0 0.0
  %1370 = vmatpush1.msra.mxu0 0.0
  %1371 = vmatprep.subr.mxu0 0.0
  %1372 = vmatpush1.msra.mxu0 0.0
  %1373 = vmatprep.subr.mxu0 0.0
  %1374 = vmatpush1.msra.mxu0 0.0
  %1375 = vmatprep.subr.mxu0 0.0
  %1376 = vmatpush1.msra.mxu0 0.0
  %1377 = vmatprep.subr.mxu0 0.0
  %1378 = vmatpush1.msra.mxu0 0.0
  %1379 = vmatprep.subr.mxu0 0.0
  %1380 = vmatpush1.msra.mxu0 0.0
  %1381 = vmatprep.subr.mxu0 0.0
  %1382 = vmatpush1.msra.mxu0 0.0
  %1383 = vmatprep.subr.mxu0 0.0
  %1384 = vmatpush1.msra.mxu0 0.0
  %1385 = vmatprep.mubr.f32.mxu0 0.0
  %v1386 = vand.u32 %v61, 4294901760
  %v1387 = vsub.f32 %v61, %v1386
  %1388 = vmatmul.mubr.f32.gmra.mrb[0].mxu0 %v1387
  %v1389 = vpop.f32.mrb[0].mxu0
  %v1390 = vadd.f32 %v1280, %v1389
  %v1391 = vpop.f32.mrb[0].mxu0
  %1392 = vmatprep.mubr.f32.mxu0 0.0
  %v1393 = vand.u32 %v64, 4294901760
  %v1394 = vsub.f32 %v64, %v1393
  %1395 = vmatmul.mubr.f32.gmra.mrb[0].mxu0 %v1394
  %v1396 = vpop.f32.mrb[0].mxu0
  %v1397 = vadd.f32 %v1286, %v1396
  %v1398 = vpop.f32.mrb[0].mxu0
  %1399 = vdwg.mxu0
  %1400 = vmatprep.subr.mxu0 0.0
  %v1401 = vand.u32 %v97, 4294901760
  %1402 = vmatpush1.msra.mxu0 %v1401
  %1403 = vmatprep.subr.mxu0 0.0
  %v1404 = vand.u32 %v98, 4294901760
  %1405 = vmatpush1.msra.mxu0 %v1404
  %1406 = vmatprep.subr.mxu0 0.0
  %v1407 = vand.u32 %v99, 4294901760
  %1408 = vmatpush1.msra.mxu0 %v1407
  %1409 = vmatprep.subr.mxu0 0.0
  %v1410 = vand.u32 %v100, 4294901760
  %1411 = vmatpush1.msra.mxu0 %v1410
  %1412 = vmatprep.subr.mxu0 0.0
  %v1413 = vand.u32 %v101, 4294901760
  %1414 = vmatpush1.msra.mxu0 %v1413
  %1415 = vmatprep.subr.mxu0 0.0
  %v1416 = vand.u32 %v102, 4294901760
  %1417 = vmatpush1.msra.mxu0 %v1416
  %1418 = vmatprep.subr.mxu0 0.0
  %v1419 = vand.u32 %v103, 4294901760
  %1420 = vmatpush1.msra.mxu0 %v1419
  %1421 = vmatprep.subr.mxu0 0.0
  %v1422 = vand.u32 %v104, 4294901760
  %1423 = vmatpush1.msra.mxu0 %v1422
  %1424 = vmatprep.subr.mxu0 0.0
  %v1425 = vand.u32 %v105, 4294901760
  %1426 = vmatpush1.msra.mxu0 %v1425
  %1427 = vmatprep.subr.mxu0 0.0
  %v1428 = vand.u32 %v106, 4294901760
  %1429 = vmatpush1.msra.mxu0 %v1428
  %1430 = vmatprep.subr.mxu0 0.0
  %v1431 = vand.u32 %v107, 4294901760
  %1432 = vmatpush1.msra.mxu0 %v1431
  %1433 = vmatprep.subr.mxu0 0.0
  %v1434 = vand.u32 %v108, 4294901760
  %1435 = vmatpush1.msra.mxu0 %v1434
  %1436 = vmatprep.subr.mxu0 0.0
  %v1437 = vand.u32 %v109, 4294901760
  %1438 = vmatpush1.msra.mxu0 %v1437
  %1439 = vmatprep.subr.mxu0 0.0
  %v1440 = vand.u32 %v110, 4294901760
  %1441 = vmatpush1.msra.mxu0 %v1440
  %1442 = vmatprep.subr.mxu0 0.0
  %v1443 = vand.u32 %v111, 4294901760
  %1444 = vmatpush1.msra.mxu0 %v1443
  %1445 = vmatprep.subr.mxu0 0.0
  %v1446 = vand.u32 %v112, 4294901760
  %1447 = vmatpush1.msra.mxu0 %v1446
  %1448 = vmatprep.subr.mxu0 0.0
  %1449 = vmatpush1.msra.mxu0 0.0
  %1450 = vmatprep.subr.mxu0 0.0
  %1451 = vmatpush1.msra.mxu0 0.0
  %1452 = vmatprep.subr.mxu0 0.0
  %1453 = vmatpush1.msra.mxu0 0.0
  %1454 = vmatprep.subr.mxu0 0.0
  %1455 = vmatpush1.msra.mxu0 0.0
  %1456 = vmatprep.subr.mxu0 0.0
  %1457 = vmatpush1.msra.mxu0 0.0
  %1458 = vmatprep.subr.mxu0 0.0
  %1459 = vmatpush1.msra.mxu0 0.0
  %1460 = vmatprep.subr.mxu0 0.0
  %1461 = vmatpush1.msra.mxu0 0.0
  %1462 = vmatprep.subr.mxu0 0.0
  %1463 = vmatpush1.msra.mxu0 0.0
  %1464 = vmatprep.subr.mxu0 0.0
  %1465 = vmatpush1.msra.mxu0 0.0
  %1466 = vmatprep.subr.mxu0 0.0
  %1467 = vmatpush1.msra.mxu0 0.0
  %1468 = vmatprep.subr.mxu0 0.0
  %1469 = vmatpush1.msra.mxu0 0.0
  %1470 = vmatprep.subr.mxu0 0.0
  %1471 = vmatpush1.msra.mxu0 0.0
  %1472 = vmatprep.subr.mxu0 0.0
  %1473 = vmatpush1.msra.mxu0 0.0
  %1474 = vmatprep.subr.mxu0 0.0
  %1475 = vmatpush1.msra.mxu0 0.0
  %1476 = vmatprep.subr.mxu0 0.0
  %1477 = vmatpush1.msra.mxu0 0.0
  %1478 = vmatprep.subr.mxu0 0.0
  %1479 = vmatpush1.msra.mxu0 0.0
  %1480 = vmatprep.mubr.f32.mxu0 0.0
  %v1481 = vand.u32 %v61, 4294901760
  %v1482 = vsub.f32 %v61, %v1481
  %v1483 = vand.u32 %v1482, 4294901760
  %1484 = vmatmul.mubr.f32.gmra.mrb[0].mxu0 %v1483
  %v1485 = vpop.f32.mrb[0].mxu0
  %v1486 = vadd.f32 %v1390, %v1485
  %v1487 = vpop.f32.mrb[0].mxu0
  %1488 = vmatprep.mubr.f32.mxu0 0.0
  %v1489 = vand.u32 %v64, 4294901760
  %v1490 = vsub.f32 %v64, %v1489
  %v1491 = vand.u32 %v1490, 4294901760
  %1492 = vmatmul.mubr.f32.gmra.mrb[0].mxu0 %v1491
  %v1493 = vpop.f32.mrb[0].mxu0
  %v1494 = vadd.f32 %v1397, %v1493
  %v1495 = vpop.f32.mrb[0].mxu0
  %1496 = vdwg.mxu0
  %1497 = vmatprep.subr.mxu0 0.0
  %v1498 = vand.u32 %v97, 4294901760
  %v1499 = vsub.f32 %v97, %v1498
  %v1500 = vand.u32 %v1499, 4294901760
  %1501 = vmatpush1.msra.mxu0 %v1500
  %1502 = vmatprep.subr.mxu0 0.0
  %v1503 = vand.u32 %v98, 4294901760
  %v1504 = vsub.f32 %v98, %v1503
  %v1505 = vand.u32 %v1504, 4294901760
  %1506 = vmatpush1.msra.mxu0 %v1505
  %1507 = vmatprep.subr.mxu0 0.0
  %v1508 = vand.u32 %v99, 4294901760
  %v1509 = vsub.f32 %v99, %v1508
  %v1510 = vand.u32 %v1509, 4294901760
  %1511 = vmatpush1.msra.mxu0 %v1510
  %1512 = vmatprep.subr.mxu0 0.0
  %v1513 = vand.u32 %v100, 4294901760
  %v1514 = vsub.f32 %v100, %v1513
  %v1515 = vand.u32 %v1514, 4294901760
  %1516 = vmatpush1.msra.mxu0 %v1515
  %1517 = vmatprep.subr.mxu0 0.0
  %v1518 = vand.u32 %v101, 4294901760
  %v1519 = vsub.f32 %v101, %v1518
  %v1520 = vand.u32 %v1519, 4294901760
  %1521 = vmatpush1.msra.mxu0 %v1520
  %1522 = vmatprep.subr.mxu0 0.0
  %v1523 = vand.u32 %v102, 4294901760
  %v1524 = vsub.f32 %v102, %v1523
  %v1525 = vand.u32 %v1524, 4294901760
  %1526 = vmatpush1.msra.mxu0 %v1525
  %1527 = vmatprep.subr.mxu0 0.0
  %v1528 = vand.u32 %v103, 4294901760
  %v1529 = vsub.f32 %v103, %v1528
  %v1530 = vand.u32 %v1529, 4294901760
  %1531 = vmatpush1.msra.mxu0 %v1530
  %1532 = vmatprep.subr.mxu0 0.0
  %v1533 = vand.u32 %v104, 4294901760
  %v1534 = vsub.f32 %v104, %v1533
  %v1535 = vand.u32 %v1534, 4294901760
  %1536 = vmatpush1.msra.mxu0 %v1535
  %1537 = vmatprep.subr.mxu0 0.0
  %v1538 = vand.u32 %v105, 4294901760
  %v1539 = vsub.f32 %v105, %v1538
  %v1540 = vand.u32 %v1539, 4294901760
  %1541 = vmatpush1.msra.mxu0 %v1540
  %1542 = vmatprep.subr.mxu0 0.0
  %v1543 = vand.u32 %v106, 4294901760
  %v1544 = vsub.f32 %v106, %v1543
  %v1545 = vand.u32 %v1544, 4294901760
  %1546 = vmatpush1.msra.mxu0 %v1545
  %1547 = vmatprep.subr.mxu0 0.0
  %v1548 = vand.u32 %v107, 4294901760
  %v1549 = vsub.f32 %v107, %v1548
  %v1550 = vand.u32 %v1549, 4294901760
  %1551 = vmatpush1.msra.mxu0 %v1550
  %1552 = vmatprep.subr.mxu0 0.0
  %v1553 = vand.u32 %v108, 4294901760
  %v1554 = vsub.f32 %v108, %v1553
  %v1555 = vand.u32 %v1554, 4294901760
  %1556 = vmatpush1.msra.mxu0 %v1555
  %1557 = vmatprep.subr.mxu0 0.0
  %v1558 = vand.u32 %v109, 4294901760
  %v1559 = vsub.f32 %v109, %v1558
  %v1560 = vand.u32 %v1559, 4294901760
  %1561 = vmatpush1.msra.mxu0 %v1560
  %1562 = vmatprep.subr.mxu0 0.0
  %v1563 = vand.u32 %v110, 4294901760
  %v1564 = vsub.f32 %v110, %v1563
  %v1565 = vand.u32 %v1564, 4294901760
  %1566 = vmatpush1.msra.mxu0 %v1565
  %1567 = vmatprep.subr.mxu0 0.0
  %v1568 = vand.u32 %v111, 4294901760
  %v1569 = vsub.f32 %v111, %v1568
  %v1570 = vand.u32 %v1569, 4294901760
  %1571 = vmatpush1.msra.mxu0 %v1570
  %1572 = vmatprep.subr.mxu0 0.0
  %v1573 = vand.u32 %v112, 4294901760
  %v1574 = vsub.f32 %v112, %v1573
  %v1575 = vand.u32 %v1574, 4294901760
  %1576 = vmatpush1.msra.mxu0 %v1575
  %1577 = vmatprep.subr.mxu0 0.0
  %1578 = vmatpush1.msra.mxu0 0.0
  %1579 = vmatprep.subr.mxu0 0.0
  %1580 = vmatpush1.msra.mxu0 0.0
  %1581 = vmatprep.subr.mxu0 0.0
  %1582 = vmatpush1.msra.mxu0 0.0
  %1583 = vmatprep.subr.mxu0 0.0
  %1584 = vmatpush1.msra.mxu0 0.0
  %1585 = vmatprep.subr.mxu0 0.0
  %1586 = vmatpush1.msra.mxu0 0.0
  %1587 = vmatprep.subr.mxu0 0.0
  %1588 = vmatpush1.msra.mxu0 0.0
  %1589 = vmatprep.subr.mxu0 0.0
  %1590 = vmatpush1.msra.mxu0 0.0
  %1591 = vmatprep.subr.mxu0 0.0
  %1592 = vmatpush1.msra.mxu0 0.0
  %1593 = vmatprep.subr.mxu0 0.0
  %1594 = vmatpush1.msra.mxu0 0.0
  %1595 = vmatprep.subr.mxu0 0.0
  %1596 = vmatpush1.msra.mxu0 0.0
  %1597 = vmatprep.subr.mxu0 0.0
  %1598 = vmatpush1.msra.mxu0 0.0
  %1599 = vmatprep.subr.mxu0 0.0
  %1600 = vmatpush1.msra.mxu0 0.0
  %1601 = vmatprep.subr.mxu0 0.0
  %1602 = vmatpush1.msra.mxu0 0.0
  %1603 = vmatprep.subr.mxu0 0.0
  %1604 = vmatpush1.msra.mxu0 0.0
  %1605 = vmatprep.subr.mxu0 0.0
  %1606 = vmatpush1.msra.mxu0 0.0
  %1607 = vmatprep.subr.mxu0 0.0
  %1608 = vmatpush1.msra.mxu0 0.0
  %1609 = vmatprep.mubr.f32.mxu0 0.0
  %v1610 = vand.u32 %v61, 4294901760
  %1611 = vmatmul.mubr.f32.gmra.mrb[0].mxu0 %v1610
  %v1612 = vpop.f32.mrb[0].mxu0
  %v1613 = vadd.f32 %v1486, %v1612
  %v1614 = vpop.f32.mrb[0].mxu0
  %1615 = vmatprep.mubr.f32.mxu0 0.0
  %v1616 = vand.u32 %v64, 4294901760
  %1617 = vmatmul.mubr.f32.gmra.mrb[0].mxu0 %v1616
  %v1618 = vpop.f32.mrb[0].mxu0
  %v1619 = vadd.f32 %v1494, %v1618
  %v1620 = vpop.f32.mrb[0].mxu0
  %1621 = vdwg.mxu0
  %1622 = vmatprep.subr.mxu0 0.0
  %v1623 = vand.u32 %v97, 4294901760
  %1624 = vmatpush1.msra.mxu0 %v1623
  %1625 = vmatprep.subr.mxu0 0.0
  %v1626 = vand.u32 %v98, 4294901760
  %1627 = vmatpush1.msra.mxu0 %v1626
  %1628 = vmatprep.subr.mxu0 0.0
  %v1629 = vand.u32 %v99, 4294901760
  %1630 = vmatpush1.msra.mxu0 %v1629
  %1631 = vmatprep.subr.mxu0 0.0
  %v1632 = vand.u32 %v100, 4294901760
  %1633 = vmatpush1.msra.mxu0 %v1632
  %1634 = vmatprep.subr.mxu0 0.0
  %v1635 = vand.u32 %v101, 4294901760
  %1636 = vmatpush1.msra.mxu0 %v1635
  %1637 = vmatprep.subr.mxu0 0.0
  %v1638 = vand.u32 %v102, 4294901760
  %1639 = vmatpush1.msra.mxu0 %v1638
  %1640 = vmatprep.subr.mxu0 0.0
  %v1641 = vand.u32 %v103, 4294901760
  %1642 = vmatpush1.msra.mxu0 %v1641
  %1643 = vmatprep.subr.mxu0 0.0
  %v1644 = vand.u32 %v104, 4294901760
  %1645 = vmatpush1.msra.mxu0 %v1644
  %1646 = vmatprep.subr.mxu0 0.0
  %v1647 = vand.u32 %v105, 4294901760
  %1648 = vmatpush1.msra.mxu0 %v1647
  %1649 = vmatprep.subr.mxu0 0.0
  %v1650 = vand.u32 %v106, 4294901760
  %1651 = vmatpush1.msra.mxu0 %v1650
  %1652 = vmatprep.subr.mxu0 0.0
  %v1653 = vand.u32 %v107, 4294901760
  %1654 = vmatpush1.msra.mxu0 %v1653
  %1655 = vmatprep.subr.mxu0 0.0
  %v1656 = vand.u32 %v108, 4294901760
  %1657 = vmatpush1.msra.mxu0 %v1656
  %1658 = vmatprep.subr.mxu0 0.0
  %v1659 = vand.u32 %v109, 4294901760
  %1660 = vmatpush1.msra.mxu0 %v1659
  %1661 = vmatprep.subr.mxu0 0.0
  %v1662 = vand.u32 %v110, 4294901760
  %1663 = vmatpush1.msra.mxu0 %v1662
  %1664 = vmatprep.subr.mxu0 0.0
  %v1665 = vand.u32 %v111, 4294901760
  %1666 = vmatpush1.msra.mxu0 %v1665
  %1667 = vmatprep.subr.mxu0 0.0
  %v1668 = vand.u32 %v112, 4294901760
  %1669 = vmatpush1.msra.mxu0 %v1668
  %1670 = vmatprep.subr.mxu0 0.0
  %1671 = vmatpush1.msra.mxu0 0.0
  %1672 = vmatprep.subr.mxu0 0.0
  %1673 = vmatpush1.msra.mxu0 0.0
  %1674 = vmatprep.subr.mxu0 0.0
  %1675 = vmatpush1.msra.mxu0 0.0
  %1676 = vmatprep.subr.mxu0 0.0
  %1677 = vmatpush1.msra.mxu0 0.0
  %1678 = vmatprep.subr.mxu0 0.0
  %1679 = vmatpush1.msra.mxu0 0.0
  %1680 = vmatprep.subr.mxu0 0.0
  %1681 = vmatpush1.msra.mxu0 0.0
  %1682 = vmatprep.subr.mxu0 0.0
  %1683 = vmatpush1.msra.mxu0 0.0
  %1684 = vmatprep.subr.mxu0 0.0
  %1685 = vmatpush1.msra.mxu0 0.0
  %1686 = vmatprep.subr.mxu0 0.0
  %1687 = vmatpush1.msra.mxu0 0.0
  %1688 = vmatprep.subr.mxu0 0.0
  %1689 = vmatpush1.msra.mxu0 0.0
  %1690 = vmatprep.subr.mxu0 0.0
  %1691 = vmatpush1.msra.mxu0 0.0
  %1692 = vmatprep.subr.mxu0 0.0
  %1693 = vmatpush1.msra.mxu0 0.0
  %1694 = vmatprep.subr.mxu0 0.0
  %1695 = vmatpush1.msra.mxu0 0.0
  %1696 = vmatprep.subr.mxu0 0.0
  %1697 = vmatpush1.msra.mxu0 0.0
  %1698 = vmatprep.subr.mxu0 0.0
  %1699 = vmatpush1.msra.mxu0 0.0
  %1700 = vmatprep.subr.mxu0 0.0
  %1701 = vmatpush1.msra.mxu0 0.0
  %1702 = vmatprep.mubr.f32.mxu0 0.0
  %v1703 = vand.u32 %v61, 4294901760
  %1704 = vmatmul.mubr.f32.gmra.mrb[0].mxu0 %v1703
  %v1705 = vpop.f32.mrb[0].mxu0
  %v1706 = vadd.f32 %v1613, %v1705
  %v1707 = vpop.f32.mrb[0].mxu0
  %1708 = vmatprep.mubr.f32.mxu0 0.0
  %v1709 = vand.u32 %v64, 4294901760
  %1710 = vmatmul.mubr.f32.gmra.mrb[0].mxu0 %v1709
  %v1711 = vpop.f32.mrb[0].mxu0
  %v1712 = vadd.f32 %v1619, %v1711
  %v1713 = vpop.f32.mrb[0].mxu0
  %1714 = vdwg.mxu0
  %v1715 = vmax.f32 %v1706, -1.0
  %v1716 = vmax.f32 %v1712, -1.0
  %v1717 = vmin.f32 %v1715, 1.0
  %v1718 = vmin.f32 %v1716, 1.0
  %vm1719 = vcmask 261120
  %1720 = vst.msk [vmem:[%s3] sm:$0xff] %vm1719, %v1717
  %1721 = vst.msk [vmem:[%s3 + $0x8] sm:$0xff] %vm1719, %v1718
  // Predicated region
  $region18: #{_render_metric_device.3} parent=0 // pred_check
    _
  $region19: #{_render_metric_device.3} parent=0 // pred_check_branch
    %1723 = sbr.rel (0) target = $region21
  $region20: #{_render_metric_device.3} parent=0 // pred_region
    _
  $region21: #{_render_metric_device.3} parent=0 // pred_fallthru
    _
  // Predicated region
  $region22: #{_render_metric_device.3} parent=0 // pred_check
    _
  $region23: #{_render_metric_device.3} parent=0 // pred_check_branch
    %1725 = sbr.rel (0) target = $region25
  $region24: #{_render_metric_device.3} parent=0 // pred_region
    _
  $region25: #{_render_metric_device.3} parent=0 // pred_fallthru
    _
  // Predicated region
  $region26: #{_render_metric_device.3} parent=0 // pred_check
    _
  $region27: #{_render_metric_device.3} parent=0 // pred_check_branch
    %1727 = sbr.rel (0) target = $region29
  $region28: #{_render_metric_device.3} parent=0 // pred_region
    _
  $region29: #{_render_metric_device.3} parent=0 // pred_fallthru
    _
  // Predicated region
  $region30: #{_render_metric_device.3} parent=0 // pred_check
    _
  $region31: #{_render_metric_device.3} parent=0 // pred_check_branch
    %1729 = sbr.rel (0) target = $region33
  $region32: #{_render_metric_device.3} parent=0 // pred_region
    _
  $region33: #{_render_metric_device.3} parent=0 // pred_fallthru
    _

</llo_original>
